<compile_context>
chip_gen: v5e
topology: v5e:2x2
jax: 0.10.0
libtpu: 0.0.40
codegen_flags: <defaults>
</compile_context>

<pallas_src>
import jax
import jax.numpy as jnp
from jax.experimental import pallas as pl
from jax.experimental.pallas import tpu as pltpu


# ----------------------------- tiled linear --------------------------------

def _pick_tile(dim, target, quantum):
    """Largest power-of-two tile <= target that divides dim (>= quantum); else full dim."""
    if dim <= target:
        return dim
    t = target
    while t >= quantum:
        if dim % t == 0:
            return t
        t //= 2
    return dim


def _linear_kernel(x_ref, w_ref, b_ref, o_ref, acc_ref):
    k = pl.program_id(2)

    @pl.when(k == 0)
    def _():
        acc_ref[...] = jnp.zeros_like(acc_ref)

    acc_ref[...] += jnp.dot(x_ref[...].astype(jnp.bfloat16),
                            w_ref[...].astype(jnp.bfloat16),
                            preferred_element_type=jnp.float32)

    @pl.when(k == pl.num_programs(2) - 1)
    def _():
        o_ref[...] = (acc_ref[...] + b_ref[...]).astype(o_ref.dtype)


def pallas_linear(x2d, w, b=None, out_dtype=jnp.float32):
    """y = x2d @ w (+ b). Tiled M/N/K grid, bf16 MXU operands, f32 accumulation."""
    M, K = x2d.shape
    _, N = w.shape
    if b is None:
        b = jnp.zeros((N,), jnp.float32)
    b2 = b.reshape(1, N).astype(jnp.float32)
    tm = _pick_tile(M, 256, 8)
    tk = _pick_tile(K, 512, 128)
    tn = _pick_tile(N, 256, 128)
    grid = (M // tm, N // tn, K // tk)
    return pl.pallas_call(
        _linear_kernel,
        out_shape=jax.ShapeDtypeStruct((M, N), out_dtype),
        grid=grid,
        in_specs=[pl.BlockSpec((tm, tk), lambda i, j, k: (i, k)),
                  pl.BlockSpec((tk, tn), lambda i, j, k: (k, j)),
                  pl.BlockSpec((1, tn), lambda i, j, k: (0, j))],
        out_specs=pl.BlockSpec((tm, tn), lambda i, j, k: (i, j)),
        scratch_shapes=[pltpu.VMEM((tm, tn), jnp.float32)],
        compiler_params=pltpu.CompilerParams(
            dimension_semantics=("parallel", "parallel", "arbitrary")),
    )(x2d, w, b2)


# ------------------------- fused attention kernel ---------------------------

def _fused_attn_kernel(q_rw_ref, q_rr_ref, k_ref, v_ref, r_ref, mask_ref,
                       wo_ref, bo_ref, out_ref, prob_ref, acc_ref):
    # q_rw/q_rr: (tq, D) bf16 (bias + scale pre-applied); k/v: (Sk, D) bf16
    # r: (P, D) bf16 (shift-source head block); mask: (tq, Sk) int8 (1 = masked)
    # wo: (D, E) bf16 per-head slab of W_O; bo: (1, E) f32
    # out: (tq, E) f32 (accumulated over heads); prob: (tq, Sk) f32
    h = pl.program_id(2)

    @pl.when(h == 0)
    def _():
        acc_ref[...] = jnp.zeros_like(acc_ref)

    ac = jax.lax.dot_general(q_rw_ref[...], k_ref[...],
                             (((1,), (1,)), ((), ())),
                             preferred_element_type=jnp.float32)        # (tq, Sk)
    bd = jax.lax.dot_general(q_rr_ref[...], r_ref[...],
                             (((1,), (1,)), ((), ())),
                             preferred_element_type=jnp.float32)        # (tq, P == Sk)

    score = ac + bd                                                     # scale already folded in
    score = jnp.where(mask_ref[...] != 0, jnp.float32(-1e9), score)
    score = score - jnp.max(score, axis=-1, keepdims=True)
    e = jnp.exp(score)
    p = e * pl.reciprocal(jnp.sum(e, axis=-1, keepdims=True), approx=True)
    prob_ref[...] = p.astype(prob_ref.dtype)

    # TODO(synk): nn.Dropout treated as identity (inference / p=0); no in-kernel RNG dropout.
    vec = jnp.dot(p.astype(jnp.bfloat16), v_ref[...],
                  preferred_element_type=jnp.float32)                   # (tq, D)
    acc_ref[...] += jnp.dot(vec.astype(jnp.bfloat16), wo_ref[...],
                            preferred_element_type=jnp.float32)         # (tq, E)

    @pl.when(h == pl.num_programs(2) - 1)
    def _():
        out_ref[...] = (acc_ref[...] + bo_ref[...]).astype(out_ref.dtype)


def _rs_index_map(B, H):
    # Per-(b, h) source head of the rel-shift; invalid slabs (r == 0) are
    # already zeroed on the q_rr side so any in-range block is fine there.
    def im(b, qt, h):
        s = B + b * H + h
        r = s % (H + 1)
        return (jnp.maximum(r - 1, 0), 0, 0)
    return im


# ------------------------------ forward pass --------------------------------

def multi_head_attention(params, Q, K, V, pos_emb, r_w_bias, r_r_bias,
                         attn_mask, mems=None):
    # `mems` accepted but unused, exactly as in the PyTorch forward.
    H, D = r_w_bias.shape
    B, Sq, E = Q.shape
    Sk = K.shape[1]
    P = pos_emb.shape[0]
    assert P == Sk, "pos_emb length must equal key length (AC + BD add)"
    scale = 1.0 / D ** 0.5

    # ---- projections (tiled Pallas matmuls, bf16 activations out) ----
    q_s = pallas_linear(Q.reshape(B * Sq, E), params["W_Q"], params["b_Q"],
                        out_dtype=jnp.bfloat16).reshape(B, Sq, H, D)
    k_s = pallas_linear(K.reshape(B * Sk, E), params["W_K"], params["b_K"],
                        out_dtype=jnp.bfloat16).reshape(B, Sk, H, D)
    v_s = pallas_linear(V.reshape(B * Sk, E), params["W_V"], params["b_V"],
                        out_dtype=jnp.bfloat16).reshape(B, Sk, H, D)
    r_s = pallas_linear(pos_emb, params["W_R"], None,
                        out_dtype=jnp.bfloat16).reshape(P, H, D).transpose(1, 0, 2)  # (H,P,D)

    # ---- Q-sized layout passes (bias + scale fused; no score-sized traffic) ----
    q_rw_t = ((q_s.astype(jnp.float32) + r_w_bias) * scale
              ).transpose(0, 2, 1, 3).astype(jnp.bfloat16)              # (B,H,Sq,D)

    # rel-shift realized as a source-side gather (mixes batch/head slabs exactly
    # like the original _rel_shift), fused with the r_r_bias add + pre-scale.
    b_idx = jnp.arange(B, dtype=jnp.int32)[:, None]
    h_idx = jnp.arange(H, dtype=jnp.int32)[None, :]
    s_flat = B + b_idx * H + h_idx
    rmod = s_flat % (H + 1)
    valid = rmod != 0                                                   # (B,H)
    src_b = s_flat // (H + 1)
    src_h = jnp.maximum(rmod - 1, 0)
    q_src = q_s[src_b, :, src_h, :].astype(jnp.float32)                 # (B,H,Sq,D)
    q_rr_sh = jnp.where(valid[:, :, None, None],
                        (q_src + r_r_bias[src_h][:, :, None, :]) * scale,
                        0.0).astype(jnp.bfloat16)                       # (B,H,Sq,D)

    k_t = k_s.transpose(0, 2, 1, 3)                                     # (B,H,Sk,D)
    v_t = v_s.transpose(0, 2, 1, 3)                                     # (B,H,Sk,D)
    mask_i8 = attn_mask.astype(jnp.int8)                                # (B,Sq,Sk), shared over heads
    w_o = params["W_O"].astype(jnp.bfloat16).reshape(H, D, E)           # per-head W_O slabs
    b_o = params["b_O"].reshape(1, E).astype(jnp.float32)

    # ---- fused attention + output projection ----
    tq = _pick_tile(Sq, 256, 8)
    grid = (B, Sq // tq, H)
    out, attn_prob = pl.pallas_call(
        _fused_attn_kernel,
        out_shape=(jax.ShapeDtypeStruct((B, Sq, E), jnp.float32),
                   jax.ShapeDtypeStruct((B, H, Sq, Sk), jnp.float32)),
        grid=grid,
        in_specs=[
            pl.BlockSpec((None, None, tq, D), lambda b, qt, h: (b, h, qt, 0)),   # q_rw
            pl.BlockSpec((None, None, tq, D), lambda b, qt, h: (b, h, qt, 0)),   # q_rr (shifted)
            pl.BlockSpec((None, None, Sk, D), lambda b, qt, h: (b, h, 0, 0)),    # k
            pl.BlockSpec((None, None, Sk, D), lambda b, qt, h: (b, h, 0, 0)),    # v
            pl.BlockSpec((None, P, D), _rs_index_map(B, H)),                     # r_s (src head)
            pl.BlockSpec((None, tq, Sk), lambda b, qt, h: (b, qt, 0)),           # mask (cached over h)
            pl.BlockSpec((None, D, E), lambda b, qt, h: (h, 0, 0)),              # W_O head slab
            pl.BlockSpec((1, E), lambda b, qt, h: (0, 0)),                       # b_O
        ],
        out_specs=(pl.BlockSpec((None, tq, E), lambda b, qt, h: (b, qt, 0)),     # out (accum over h)
                   pl.BlockSpec((None, None, tq, Sk), lambda b, qt, h: (b, h, qt, 0))),
        scratch_shapes=[pltpu.VMEM((tq, E), jnp.float32)],
        compiler_params=pltpu.CompilerParams(
            dimension_semantics=("parallel", "parallel", "arbitrary")),
    )(q_rw_t, q_rr_sh, k_t, v_t, r_s, mask_i8, w_o, b_o)

    return out, attn_prob


# --------------------------- pure-JAX reference ------------------------------

def _rel_shift(x):
    """Exact reproduction of MultiHeadAttention._rel_shift (operates on dims 0,1)."""
    B, H, Sq, P = x.shape
    zero_pad = jnp.zeros((B, 1, Sq, P), x.dtype)
    x_padded = jnp.concatenate([zero_pad, x], axis=1)          # (B, H+1, Sq, P)
    x_padded = x_padded.reshape(H + 1, B, Sq, P)               # torch .view == row-major reshape
    return x_padded[1:].reshape(B, H, Sq, P)


def reference(params, Q, K, V, pos_emb, r_w_bias, r_r_bias, attn_mask):
    n_head, d_head = r_w_bias.shape
    B, Sq, _ = Q.shape
    scale = 1.0 / d_head ** 0.5
    q_s = (Q @ params["W_Q"] + params["b_Q"]).reshape(B, Sq, n_head, d_head)
    Q_rw = (q_s + r_w_bias).transpose(0, 2, 1, 3)
    Q_rr = (q_s + r_r_bias).transpose(0, 2, 1, 3)
    k_s = (K @ params["W_K"] + params["b_K"]).reshape(B, -1, n_head, d_head).transpose(0, 2, 1, 3)
    v_s = (V @ params["W_V"] + params["b_V"]).reshape(B, -1, n_head, d_head).transpose(0, 2, 1, 3)
    r_s = (pos_emb @ params["W_R"]).reshape(-1, n_head, d_head).transpose(1, 0, 2)
    AC = jnp.einsum("bhqd,bhkd->bhqk", Q_rw, k_s)
    BD = _rel_shift(jnp.einsum("bhqd,hpd->bhqp", Q_rr, r_s))
    score = (AC + BD) * scale
    score = jnp.where(jnp.broadcast_to(attn_mask[:, None], score.shape), -1e9, score)
    prob = jax.nn.softmax(score, axis=-1)
    vec = jnp.einsum("bhqk,bhkd->bhqd", prob, v_s)
    vec = vec.transpose(0, 2, 1, 3).reshape(B, Sq, n_head * d_head)
    return vec @ params["W_O"] + params["b_O"], prob


# --------------------------------- main --------------------------------------

if __name__ == "__main__":
    B, S, d_embed, n_head, d_head = 2, 8, 32, 4, 8
    d_model = n_head * d_head

    key = jax.random.PRNGKey(0)
    ks = jax.random.split(key, 16)
    params = {
        "W_Q": jax.random.normal(ks[0], (d_embed, d_model), jnp.float32) * 0.05,
        "b_Q": jax.random.normal(ks[1], (d_model,), jnp.float32) * 0.05,
        "W_K": jax.random.normal(ks[2], (d_embed, d_model), jnp.float32) * 0.05,
        "b_K": jax.random.normal(ks[3], (d_model,), jnp.float32) * 0.05,
        "W_V": jax.random.normal(ks[4], (d_embed, d_model), jnp.float32) * 0.05,
        "b_V": jax.random.normal(ks[5], (d_model,), jnp.float32) * 0.05,
        "W_R": jax.random.normal(ks[6], (d_embed, d_model), jnp.float32) * 0.05,  # r_net (no bias)
        "W_O": jax.random.normal(ks[7], (d_model, d_embed), jnp.float32) * 0.05,
        "b_O": jax.random.normal(ks[8], (d_embed,), jnp.float32) * 0.05,
    }

    Q = jax.random.normal(ks[10], (B, S, d_embed), jnp.float32)
    K = jax.random.normal(ks[11], (B, S, d_embed), jnp.float32)
    V = jax.random.normal(ks[12], (B, S, d_embed), jnp.float32)
    pos_emb = jax.random.normal(ks[13], (S, d_embed), jnp.float32)
    r_w_bias = jax.random.normal(ks[14], (n_head, d_head), jnp.float32) * 0.05
    r_r_bias = jax.random.normal(ks[15], (n_head, d_head), jnp.float32) * 0.05
    attn_mask = jnp.broadcast_to(jnp.triu(jnp.ones((S, S), dtype=bool), k=1), (B, S, S))

    fwd = jax.jit(multi_head_attention)
    out, prob = jax.block_until_ready(
        fwd(params, Q, K, V, pos_emb, r_w_bias, r_r_bias, attn_mask))

    ref_out, ref_prob = reference(params, Q, K, V, pos_emb, r_w_bias, r_r_bias, attn_mask)
    assert out.shape == (B, S, d_embed) and prob.shape == (B, n_head, S, S)
    assert jnp.allclose(out, ref_out, atol=5e-2, rtol=5e-2)
    assert jnp.allclose(prob, ref_prob, atol=5e-2, rtol=5e-2)
    print("KERNEL_OK")
</pallas_src>

<mosaic_0001>
module attributes {stable_mosaic.version = 11 : i64} {
  func.func @_linear_kernel(%arg0: i32, %arg1: i32, %arg2: i32, %arg3: memref<8x32xf32, #tpu.memory_space<vmem>>, %arg4: memref<32x32xf32, #tpu.memory_space<vmem>>, %arg5: memref<1x32xf32, #tpu.memory_space<vmem>>, %arg6: memref<8x32xbf16, #tpu.memory_space<vmem>>, %arg7: memref<8x32xf32, #tpu.memory_space<vmem>>) attributes {dimension_semantics = [#tpu.dimension_semantics<parallel>, #tpu.dimension_semantics<parallel>, #tpu.dimension_semantics<arbitrary>], iteration_bounds = array<i64: 1, 1, 1>, scalar_prefetch = 0 : i64, scratch_operands = 1 : i64, tpu.core_type = #tpu.core_type<tc>, window_params = [{transform_indices = @transform_0, window_bounds = array<i64: 8, 32>}, {transform_indices = @transform_1, window_bounds = array<i64: 32, 32>}, {transform_indices = @transform_2, window_bounds = array<i64: 1, 32>}, {transform_indices = @transform_3, window_bounds = array<i64: 8, 32>}]} {
    %c0_i32 = arith.constant 0 : i32
    %0 = arith.cmpi eq, %arg2, %c0_i32 : i32
    %1 = arith.extui %0 : i1 to i32
    %c0_i32_0 = arith.constant 0 : i32
    %2 = arith.cmpi ne, %1, %c0_i32_0 : i32
    scf.if %2 {
      %cst_10 = arith.constant 0.000000e+00 : f32
      %14 = vector.broadcast %cst_10 : f32 to vector<8x32xf32>
      %c0_11 = arith.constant 0 : index
      %c0_12 = arith.constant 0 : index
      %15 = vector.load %arg7[%c0_11, %c0_12] : memref<8x32xf32, #tpu.memory_space<vmem>>, vector<8x32xf32>
      tpu.vector_store %arg7[%c0_11, %c0_12], %14 {strides = array<i32>} : memref<8x32xf32, #tpu.memory_space<vmem>>, vector<8x32xf32>,
    } else {
    }
    %c0 = arith.constant 0 : index
    %c0_1 = arith.constant 0 : index
    %3 = vector.load %arg7[%c0, %c0_1] : memref<8x32xf32, #tpu.memory_space<vmem>>, vector<8x32xf32>
    %c0_2 = arith.constant 0 : index
    %c0_3 = arith.constant 0 : index
    %4 = vector.load %arg3[%c0_2, %c0_3] : memref<8x32xf32, #tpu.memory_space<vmem>>, vector<8x32xf32>
    %5 = arith.truncf %4 : vector<8x32xf32> to vector<8x32xbf16>
    %c0_4 = arith.constant 0 : index
    %c0_5 = arith.constant 0 : index
    %6 = vector.load %arg4[%c0_4, %c0_5] : memref<32x32xf32, #tpu.memory_space<vmem>>, vector<32x32xf32>
    %7 = arith.truncf %6 : vector<32x32xf32> to vector<32x32xbf16>
    %cst = arith.constant dense<0.000000e+00> : vector<8x32xf32>
    %8 = tpu.matmul %5, %7, %cst {dimension_numbers = #tpu.dot_dimension_numbers<[1], [0], [0], [1], [0, 0, 1, 1], [], []>} : vector<8x32xbf16>, vector<32x32xbf16>, vector<8x32xf32> -> vector<8x32xf32>
    %9 = arith.addf %3, %8 : vector<8x32xf32>
    %c0_6 = arith.constant 0 : index
    %c0_7 = arith.constant 0 : index
    %10 = vector.load %arg7[%c0_6, %c0_7] : memref<8x32xf32, #tpu.memory_space<vmem>>, vector<8x32xf32>
    tpu.vector_store %arg7[%c0_6, %c0_7], %9 {strides = array<i32>} : memref<8x32xf32, #tpu.memory_space<vmem>>, vector<8x32xf32>,
    %c0_i32_8 = arith.constant 0 : i32
    %11 = arith.cmpi eq, %arg2, %c0_i32_8 : i32
    %12 = arith.extui %11 : i1 to i32
    %c0_i32_9 = arith.constant 0 : i32
    %13 = arith.cmpi ne, %12, %c0_i32_9 : i32
    scf.if %13 {
      %c0_10 = arith.constant 0 : index
      %c0_11 = arith.constant 0 : index
      %14 = vector.load %arg7[%c0_10, %c0_11] : memref<8x32xf32, #tpu.memory_space<vmem>>, vector<8x32xf32>
      %c0_12 = arith.constant 0 : index
      %c0_13 = arith.constant 0 : index
      %15 = vector.load %arg5[%c0_12, %c0_13] : memref<1x32xf32, #tpu.memory_space<vmem>>, vector<1x32xf32>
      %16 = vector.broadcast %15 : vector<1x32xf32> to vector<8x32xf32>
      %17 = arith.addf %14, %16 : vector<8x32xf32>
      %18 = arith.truncf %17 : vector<8x32xf32> to vector<8x32xbf16>
      %c0_14 = arith.constant 0 : index
      %c0_15 = arith.constant 0 : index
      %19 = vector.load %arg6[%c0_14, %c0_15] : memref<8x32xbf16, #tpu.memory_space<vmem>>, vector<8x32xbf16>
      tpu.vector_store %arg6[%c0_14, %c0_15], %18 {strides = array<i32>} : memref<8x32xbf16, #tpu.memory_space<vmem>>, vector<8x32xbf16>,
    } else {
    }
    return
  }
  func.func @transform_0(%arg0: i32, %arg1: i32, %arg2: i32) -> (i32, i32) {
    %c0_i32 = arith.constant 0 : i32
    return %arg0, %arg2 : i32, i32
  }
  func.func @transform_1(%arg0: i32, %arg1: i32, %arg2: i32) -> (i32, i32) {
    %c0_i32 = arith.constant 0 : i32
    return %arg2, %arg1 : i32, i32
  }
  func.func @transform_2(%arg0: i32, %arg1: i32, %arg2: i32) -> (i32, i32) {
    %c0_i32 = arith.constant 0 : i32
    %c0_i32_0 = arith.constant 0 : i32
    return %c0_i32, %arg1 : i32, i32
  }
  func.func @transform_3(%arg0: i32, %arg1: i32, %arg2: i32) -> (i32, i32) {
    %c0_i32 = arith.constant 0 : i32
    return %arg0, %arg1 : i32, i32
  }
}

module attributes {stable_mosaic.version = 11 : i64} {
  func.func @_linear_kernel(%arg0: i32, %arg1: i32, %arg2: i32, %arg3: memref<16x32xf32, #tpu.memory_space<vmem>>, %arg4: memref<32x32xf32, #tpu.memory_space<vmem>>, %arg5: memref<1x32xf32, #tpu.memory_space<vmem>>, %arg6: memref<16x32xbf16, #tpu.memory_space<vmem>>, %arg7: memref<16x32xf32, #tpu.memory_space<vmem>>) attributes {dimension_semantics = [#tpu.dimension_semantics<parallel>, #tpu.dimension_semantics<parallel>, #tpu.dimension_semantics<arbitrary>], iteration_bounds = array<i64: 1, 1, 1>, scalar_prefetch = 0 : i64, scratch_operands = 1 : i64, tpu.core_type = #tpu.core_type<tc>, window_params = [{transform_indices = @transform_0, window_bounds = array<i64: 16, 32>}, {transform_indices = @transform_1, window_bounds = array<i64: 32, 32>}, {transform_indices = @transform_2, window_bounds = array<i64: 1, 32>}, {transform_indices = @transform_3, window_bounds = array<i64: 16, 32>}]} {
    %c0_i32 = arith.constant 0 : i32
    %0 = arith.cmpi eq, %arg2, %c0_i32 : i32
    %1 = arith.extui %0 : i1 to i32
    %c0_i32_0 = arith.constant 0 : i32
    %2 = arith.cmpi ne, %1, %c0_i32_0 : i32
    scf.if %2 {
      %cst_10 = arith.constant 0.000000e+00 : f32
      %14 = vector.broadcast %cst_10 : f32 to vector<16x32xf32>
      %c0_11 = arith.constant 0 : index
      %c0_12 = arith.constant 0 : index
      %15 = vector.load %arg7[%c0_11, %c0_12] : memref<16x32xf32, #tpu.memory_space<vmem>>, vector<16x32xf32>
      tpu.vector_store %arg7[%c0_11, %c0_12], %14 {strides = array<i32>} : memref<16x32xf32, #tpu.memory_space<vmem>>, vector<16x32xf32>,
    } else {
    }
    %c0 = arith.constant 0 : index
    %c0_1 = arith.constant 0 : index
    %3 = vector.load %arg7[%c0, %c0_1] : memref<16x32xf32, #tpu.memory_space<vmem>>, vector<16x32xf32>
    %c0_2 = arith.constant 0 : index
    %c0_3 = arith.constant 0 : index
    %4 = vector.load %arg3[%c0_2, %c0_3] : memref<16x32xf32, #tpu.memory_space<vmem>>, vector<16x32xf32>
    %5 = arith.truncf %4 : vector<16x32xf32> to vector<16x32xbf16>
    %c0_4 = arith.constant 0 : index
    %c0_5 = arith.constant 0 : index
    %6 = vector.load %arg4[%c0_4, %c0_5] : memref<32x32xf32, #tpu.memory_space<vmem>>, vector<32x32xf32>
    %7 = arith.truncf %6 : vector<32x32xf32> to vector<32x32xbf16>
    %cst = arith.constant dense<0.000000e+00> : vector<16x32xf32>
    %8 = tpu.matmul %5, %7, %cst {dimension_numbers = #tpu.dot_dimension_numbers<[1], [0], [0], [1], [0, 0, 1, 1], [], []>} : vector<16x32xbf16>, vector<32x32xbf16>, vector<16x32xf32> -> vector<16x32xf32>
    %9 = arith.addf %3, %8 : vector<16x32xf32>
    %c0_6 = arith.constant 0 : index
    %c0_7 = arith.constant 0 : index
    %10 = vector.load %arg7[%c0_6, %c0_7] : memref<16x32xf32, #tpu.memory_space<vmem>>, vector<16x32xf32>
    tpu.vector_store %arg7[%c0_6, %c0_7], %9 {strides = array<i32>} : memref<16x32xf32, #tpu.memory_space<vmem>>, vector<16x32xf32>,
    %c0_i32_8 = arith.constant 0 : i32
    %11 = arith.cmpi eq, %arg2, %c0_i32_8 : i32
    %12 = arith.extui %11 : i1 to i32
    %c0_i32_9 = arith.constant 0 : i32
    %13 = arith.cmpi ne, %12, %c0_i32_9 : i32
    scf.if %13 {
      %c0_10 = arith.constant 0 : index
      %c0_11 = arith.constant 0 : index
      %14 = vector.load %arg7[%c0_10, %c0_11] : memref<16x32xf32, #tpu.memory_space<vmem>>, vector<16x32xf32>
      %c0_12 = arith.constant 0 : index
      %c0_13 = arith.constant 0 : index
      %15 = vector.load %arg5[%c0_12, %c0_13] : memref<1x32xf32, #tpu.memory_space<vmem>>, vector<1x32xf32>
      %16 = vector.broadcast %15 : vector<1x32xf32> to vector<16x32xf32>
      %17 = arith.addf %14, %16 : vector<16x32xf32>
      %18 = arith.truncf %17 : vector<16x32xf32> to vector<16x32xbf16>
      %c0_14 = arith.constant 0 : index
      %c0_15 = arith.constant 0 : index
      %19 = vector.load %arg6[%c0_14, %c0_15] : memref<16x32xbf16, #tpu.memory_space<vmem>>, vector<16x32xbf16>
      tpu.vector_store %arg6[%c0_14, %c0_15], %18 {strides = array<i32>} : memref<16x32xbf16, #tpu.memory_space<vmem>>, vector<16x32xbf16>,
    } else {
    }
    return
  }
  func.func @transform_0(%arg0: i32, %arg1: i32, %arg2: i32) -> (i32, i32) {
    %c0_i32 = arith.constant 0 : i32
    return %arg0, %arg2 : i32, i32
  }
  func.func @transform_1(%arg0: i32, %arg1: i32, %arg2: i32) -> (i32, i32) {
    %c0_i32 = arith.constant 0 : i32
    return %arg2, %arg1 : i32, i32
  }
  func.func @transform_2(%arg0: i32, %arg1: i32, %arg2: i32) -> (i32, i32) {
    %c0_i32 = arith.constant 0 : i32
    %c0_i32_0 = arith.constant 0 : i32
    return %c0_i32, %arg1 : i32, i32
  }
  func.func @transform_3(%arg0: i32, %arg1: i32, %arg2: i32) -> (i32, i32) {
    %c0_i32 = arith.constant 0 : i32
    return %arg0, %arg1 : i32, i32
  }
}

module attributes {stable_mosaic.version = 11 : i64} {
  func.func @_linear_kernel(%arg0: i32, %arg1: i32, %arg2: i32, %arg3: memref<16x32xf32, #tpu.memory_space<vmem>>, %arg4: memref<32x32xf32, #tpu.memory_space<vmem>>, %arg5: memref<1x32xf32, #tpu.memory_space<vmem>>, %arg6: memref<16x32xbf16, #tpu.memory_space<vmem>>, %arg7: memref<16x32xf32, #tpu.memory_space<vmem>>) attributes {dimension_semantics = [#tpu.dimension_semantics<parallel>, #tpu.dimension_semantics<parallel>, #tpu.dimension_semantics<arbitrary>], iteration_bounds = array<i64: 1, 1, 1>, scalar_prefetch = 0 : i64, scratch_operands = 1 : i64, tpu.core_type = #tpu.core_type<tc>, window_params = [{transform_indices = @transform_0, window_bounds = array<i64: 16, 32>}, {transform_indices = @transform_1, window_bounds = array<i64: 32, 32>}, {transform_indices = @transform_2, window_bounds = array<i64: 1, 32>}, {transform_indices = @transform_3, window_bounds = array<i64: 16, 32>}]} {
    %c0_i32 = arith.constant 0 : i32
    %0 = arith.cmpi eq, %arg2, %c0_i32 : i32
    %1 = arith.extui %0 : i1 to i32
    %c0_i32_0 = arith.constant 0 : i32
    %2 = arith.cmpi ne, %1, %c0_i32_0 : i32
    scf.if %2 {
      %cst_10 = arith.constant 0.000000e+00 : f32
      %14 = vector.broadcast %cst_10 : f32 to vector<16x32xf32>
      %c0_11 = arith.constant 0 : index
      %c0_12 = arith.constant 0 : index
      %15 = vector.load %arg7[%c0_11, %c0_12] : memref<16x32xf32, #tpu.memory_space<vmem>>, vector<16x32xf32>
      tpu.vector_store %arg7[%c0_11, %c0_12], %14 {strides = array<i32>} : memref<16x32xf32, #tpu.memory_space<vmem>>, vector<16x32xf32>,
    } else {
    }
    %c0 = arith.constant 0 : index
    %c0_1 = arith.constant 0 : index
    %3 = vector.load %arg7[%c0, %c0_1] : memref<16x32xf32, #tpu.memory_space<vmem>>, vector<16x32xf32>
    %c0_2 = arith.constant 0 : index
    %c0_3 = arith.constant 0 : index
    %4 = vector.load %arg3[%c0_2, %c0_3] : memref<16x32xf32, #tpu.memory_space<vmem>>, vector<16x32xf32>
    %5 = arith.truncf %4 : vector<16x32xf32> to vector<16x32xbf16>
    %c0_4 = arith.constant 0 : index
    %c0_5 = arith.constant 0 : index
    %6 = vector.load %arg4[%c0_4, %c0_5] : memref<32x32xf32, #tpu.memory_space<vmem>>, vector<32x32xf32>
    %7 = arith.truncf %6 : vector<32x32xf32> to vector<32x32xbf16>
    %cst = arith.constant dense<0.000000e+00> : vector<16x32xf32>
    %8 = tpu.matmul %5, %7, %cst {dimension_numbers = #tpu.dot_dimension_numbers<[1], [0], [0], [1], [0, 0, 1, 1], [], []>} : vector<16x32xbf16>, vector<32x32xbf16>, vector<16x32xf32> -> vector<16x32xf32>
    %9 = arith.addf %3, %8 : vector<16x32xf32>
    %c0_6 = arith.constant 0 : index
    %c0_7 = arith.constant 0 : index
    %10 = vector.load %arg7[%c0_6, %c0_7] : memref<16x32xf32, #tpu.memory_space<vmem>>, vector<16x32xf32>
    tpu.vector_store %arg7[%c0_6, %c0_7], %9 {strides = array<i32>} : memref<16x32xf32, #tpu.memory_space<vmem>>, vector<16x32xf32>,
    %c0_i32_8 = arith.constant 0 : i32
    %11 = arith.cmpi eq, %arg2, %c0_i32_8 : i32
    %12 = arith.extui %11 : i1 to i32
    %c0_i32_9 = arith.constant 0 : i32
    %13 = arith.cmpi ne, %12, %c0_i32_9 : i32
    scf.if %13 {
      %c0_10 = arith.constant 0 : index
      %c0_11 = arith.constant 0 : index
      %14 = vector.load %arg7[%c0_10, %c0_11] : memref<16x32xf32, #tpu.memory_space<vmem>>, vector<16x32xf32>
      %c0_12 = arith.constant 0 : index
      %c0_13 = arith.constant 0 : index
      %15 = vector.load %arg5[%c0_12, %c0_13] : memref<1x32xf32, #tpu.memory_space<vmem>>, vector<1x32xf32>
      %16 = vector.broadcast %15 : vector<1x32xf32> to vector<16x32xf32>
      %17 = arith.addf %14, %16 : vector<16x32xf32>
      %18 = arith.truncf %17 : vector<16x32xf32> to vector<16x32xbf16>
      %c0_14 = arith.constant 0 : index
      %c0_15 = arith.constant 0 : index
      %19 = vector.load %arg6[%c0_14, %c0_15] : memref<16x32xbf16, #tpu.memory_space<vmem>>, vector<16x32xbf16>
      tpu.vector_store %arg6[%c0_14, %c0_15], %18 {strides = array<i32>} : memref<16x32xbf16, #tpu.memory_space<vmem>>, vector<16x32xbf16>,
    } else {
    }
    return
  }
  func.func @transform_0(%arg0: i32, %arg1: i32, %arg2: i32) -> (i32, i32) {
    %c0_i32 = arith.constant 0 : i32
    return %arg0, %arg2 : i32, i32
  }
  func.func @transform_1(%arg0: i32, %arg1: i32, %arg2: i32) -> (i32, i32) {
    %c0_i32 = arith.constant 0 : i32
    return %arg2, %arg1 : i32, i32
  }
  func.func @transform_2(%arg0: i32, %arg1: i32, %arg2: i32) -> (i32, i32) {
    %c0_i32 = arith.constant 0 : i32
    %c0_i32_0 = arith.constant 0 : i32
    return %c0_i32, %arg1 : i32, i32
  }
  func.func @transform_3(%arg0: i32, %arg1: i32, %arg2: i32) -> (i32, i32) {
    %c0_i32 = arith.constant 0 : i32
    return %arg0, %arg1 : i32, i32
  }
}

module attributes {stable_mosaic.version = 11 : i64} {
  func.func @_linear_kernel(%arg0: i32, %arg1: i32, %arg2: i32, %arg3: memref<16x32xf32, #tpu.memory_space<vmem>>, %arg4: memref<32x32xf32, #tpu.memory_space<vmem>>, %arg5: memref<1x32xf32, #tpu.memory_space<vmem>>, %arg6: memref<16x32xbf16, #tpu.memory_space<vmem>>, %arg7: memref<16x32xf32, #tpu.memory_space<vmem>>) attributes {dimension_semantics = [#tpu.dimension_semantics<parallel>, #tpu.dimension_semantics<parallel>, #tpu.dimension_semantics<arbitrary>], iteration_bounds = array<i64: 1, 1, 1>, scalar_prefetch = 0 : i64, scratch_operands = 1 : i64, tpu.core_type = #tpu.core_type<tc>, window_params = [{transform_indices = @transform_0, window_bounds = array<i64: 16, 32>}, {transform_indices = @transform_1, window_bounds = array<i64: 32, 32>}, {transform_indices = @transform_2, window_bounds = array<i64: 1, 32>}, {transform_indices = @transform_3, window_bounds = array<i64: 16, 32>}]} {
    %c0_i32 = arith.constant 0 : i32
    %0 = arith.cmpi eq, %arg2, %c0_i32 : i32
    %1 = arith.extui %0 : i1 to i32
    %c0_i32_0 = arith.constant 0 : i32
    %2 = arith.cmpi ne, %1, %c0_i32_0 : i32
    scf.if %2 {
      %cst_10 = arith.constant 0.000000e+00 : f32
      %14 = vector.broadcast %cst_10 : f32 to vector<16x32xf32>
      %c0_11 = arith.constant 0 : index
      %c0_12 = arith.constant 0 : index
      %15 = vector.load %arg7[%c0_11, %c0_12] : memref<16x32xf32, #tpu.memory_space<vmem>>, vector<16x32xf32>
      tpu.vector_store %arg7[%c0_11, %c0_12], %14 {strides = array<i32>} : memref<16x32xf32, #tpu.memory_space<vmem>>, vector<16x32xf32>,
    } else {
    }
    %c0 = arith.constant 0 : index
    %c0_1 = arith.constant 0 : index
    %3 = vector.load %arg7[%c0, %c0_1] : memref<16x32xf32, #tpu.memory_space<vmem>>, vector<16x32xf32>
    %c0_2 = arith.constant 0 : index
    %c0_3 = arith.constant 0 : index
    %4 = vector.load %arg3[%c0_2, %c0_3] : memref<16x32xf32, #tpu.memory_space<vmem>>, vector<16x32xf32>
    %5 = arith.truncf %4 : vector<16x32xf32> to vector<16x32xbf16>
    %c0_4 = arith.constant 0 : index
    %c0_5 = arith.constant 0 : index
    %6 = vector.load %arg4[%c0_4, %c0_5] : memref<32x32xf32, #tpu.memory_space<vmem>>, vector<32x32xf32>
    %7 = arith.truncf %6 : vector<32x32xf32> to vector<32x32xbf16>
    %cst = arith.constant dense<0.000000e+00> : vector<16x32xf32>
    %8 = tpu.matmul %5, %7, %cst {dimension_numbers = #tpu.dot_dimension_numbers<[1], [0], [0], [1], [0, 0, 1, 1], [], []>} : vector<16x32xbf16>, vector<32x32xbf16>, vector<16x32xf32> -> vector<16x32xf32>
    %9 = arith.addf %3, %8 : vector<16x32xf32>
    %c0_6 = arith.constant 0 : index
    %c0_7 = arith.constant 0 : index
    %10 = vector.load %arg7[%c0_6, %c0_7] : memref<16x32xf32, #tpu.memory_space<vmem>>, vector<16x32xf32>
    tpu.vector_store %arg7[%c0_6, %c0_7], %9 {strides = array<i32>} : memref<16x32xf32, #tpu.memory_space<vmem>>, vector<16x32xf32>,
    %c0_i32_8 = arith.constant 0 : i32
    %11 = arith.cmpi eq, %arg2, %c0_i32_8 : i32
    %12 = arith.extui %11 : i1 to i32
    %c0_i32_9 = arith.constant 0 : i32
    %13 = arith.cmpi ne, %12, %c0_i32_9 : i32
    scf.if %13 {
      %c0_10 = arith.constant 0 : index
      %c0_11 = arith.constant 0 : index
      %14 = vector.load %arg7[%c0_10, %c0_11] : memref<16x32xf32, #tpu.memory_space<vmem>>, vector<16x32xf32>
      %c0_12 = arith.constant 0 : index
      %c0_13 = arith.constant 0 : index
      %15 = vector.load %arg5[%c0_12, %c0_13] : memref<1x32xf32, #tpu.memory_space<vmem>>, vector<1x32xf32>
      %16 = vector.broadcast %15 : vector<1x32xf32> to vector<16x32xf32>
      %17 = arith.addf %14, %16 : vector<16x32xf32>
      %18 = arith.truncf %17 : vector<16x32xf32> to vector<16x32xbf16>
      %c0_14 = arith.constant 0 : index
      %c0_15 = arith.constant 0 : index
      %19 = vector.load %arg6[%c0_14, %c0_15] : memref<16x32xbf16, #tpu.memory_space<vmem>>, vector<16x32xbf16>
      tpu.vector_store %arg6[%c0_14, %c0_15], %18 {strides = array<i32>} : memref<16x32xbf16, #tpu.memory_space<vmem>>, vector<16x32xbf16>,
    } else {
    }
    return
  }
  func.func @transform_0(%arg0: i32, %arg1: i32, %arg2: i32) -> (i32, i32) {
    %c0_i32 = arith.constant 0 : i32
    return %arg0, %arg2 : i32, i32
  }
  func.func @transform_1(%arg0: i32, %arg1: i32, %arg2: i32) -> (i32, i32) {
    %c0_i32 = arith.constant 0 : i32
    return %arg2, %arg1 : i32, i32
  }
  func.func @transform_2(%arg0: i32, %arg1: i32, %arg2: i32) -> (i32, i32) {
    %c0_i32 = arith.constant 0 : i32
    %c0_i32_0 = arith.constant 0 : i32
    return %c0_i32, %arg1 : i32, i32
  }
  func.func @transform_3(%arg0: i32, %arg1: i32, %arg2: i32) -> (i32, i32) {
    %c0_i32 = arith.constant 0 : i32
    return %arg0, %arg1 : i32, i32
  }
}

module attributes {stable_mosaic.version = 11 : i64} {
  func.func @_fused_attn_kernel(%arg0: i32, %arg1: i32, %arg2: i32, %arg3: memref<1x1x8x8xbf16, #tpu.memory_space<vmem>>, %arg4: memref<1x1x8x8xbf16, #tpu.memory_space<vmem>>, %arg5: memref<1x1x8x8xbf16, #tpu.memory_space<vmem>>, %arg6: memref<1x1x8x8xbf16, #tpu.memory_space<vmem>>, %arg7: memref<1x8x8xbf16, #tpu.memory_space<vmem>>, %arg8: memref<1x8x8xi8, #tpu.memory_space<vmem>>, %arg9: memref<1x8x32xbf16, #tpu.memory_space<vmem>>, %arg10: memref<1x32xf32, #tpu.memory_space<vmem>>, %arg11: memref<1x8x32xf32, #tpu.memory_space<vmem>>, %arg12: memref<1x1x8x8xf32, #tpu.memory_space<vmem>>, %arg13: memref<8x32xf32, #tpu.memory_space<vmem>>) attributes {dimension_semantics = [#tpu.dimension_semantics<parallel>, #tpu.dimension_semantics<parallel>, #tpu.dimension_semantics<arbitrary>], iteration_bounds = array<i64: 2, 1, 4>, scalar_prefetch = 0 : i64, scratch_operands = 1 : i64, tpu.core_type = #tpu.core_type<tc>, window_params = [{transform_indices = @transform_0, window_bounds = array<i64: 1, 1, 8, 8>}, {transform_indices = @transform_1, window_bounds = array<i64: 1, 1, 8, 8>}, {transform_indices = @transform_2, window_bounds = array<i64: 1, 1, 8, 8>}, {transform_indices = @transform_3, window_bounds = array<i64: 1, 1, 8, 8>}, {transform_indices = @transform_4, window_bounds = array<i64: 1, 8, 8>}, {transform_indices = @transform_5, window_bounds = array<i64: 1, 8, 8>}, {transform_indices = @transform_6, window_bounds = array<i64: 1, 8, 32>}, {pipeline_mode = #tpu.pipeline_mode<synchronous>, transform_indices = @transform_7, window_bounds = array<i64: 1, 32>}, {transform_indices = @transform_8, window_bounds = array<i64: 1, 8, 32>}, {transform_indices = @transform_9, window_bounds = array<i64: 1, 1, 8, 8>}]} {
    %c0_i32 = arith.constant 0 : i32
    %0 = arith.cmpi eq, %arg2, %c0_i32 : i32
    %1 = arith.extui %0 : i1 to i32
    %c0_i32_0 = arith.constant 0 : i32
    %2 = arith.cmpi ne, %1, %c0_i32_0 : i32
    scf.if %2 {
      %cst_40 = arith.constant 0.000000e+00 : f32
      %47 = vector.broadcast %cst_40 : f32 to vector<8x32xf32>
      %c0_41 = arith.constant 0 : index
      %c0_42 = arith.constant 0 : index
      %48 = vector.load %arg13[%c0_41, %c0_42] : memref<8x32xf32, #tpu.memory_space<vmem>>, vector<8x32xf32>
      tpu.vector_store %arg13[%c0_41, %c0_42], %47 {strides = array<i32>} : memref<8x32xf32, #tpu.memory_space<vmem>>, vector<8x32xf32>,
    } else {
    }
    %c0 = arith.constant 0 : index
    %c0_1 = arith.constant 0 : index
    %c0_2 = arith.constant 0 : index
    %c0_3 = arith.constant 0 : index
    %3 = vector.load %arg3[%c0, %c0_1, %c0_2, %c0_3] : memref<1x1x8x8xbf16, #tpu.memory_space<vmem>>, vector<1x1x8x8xbf16>
    %4 = vector.shape_cast %3 : vector<1x1x8x8xbf16> to vector<8x8xbf16>
    %c0_4 = arith.constant 0 : index
    %c0_5 = arith.constant 0 : index
    %c0_6 = arith.constant 0 : index
    %c0_7 = arith.constant 0 : index
    %5 = vector.load %arg5[%c0_4, %c0_5, %c0_6, %c0_7] : memref<1x1x8x8xbf16, #tpu.memory_space<vmem>>, vector<1x1x8x8xbf16>
    %6 = vector.shape_cast %5 : vector<1x1x8x8xbf16> to vector<8x8xbf16>
    %cst = arith.constant dense<0.000000e+00> : vector<8x8xf32>
    %7 = tpu.matmul %4, %6, %cst {dimension_numbers = #tpu.dot_dimension_numbers<[1], [1], [0], [0], [0, 0, 1, 0], [], []>} : vector<8x8xbf16>, vector<8x8xbf16>, vector<8x8xf32> -> vector<8x8xf32>
    %c0_8 = arith.constant 0 : index
    %c0_9 = arith.constant 0 : index
    %c0_10 = arith.constant 0 : index
    %c0_11 = arith.constant 0 : index
    %8 = vector.load %arg4[%c0_8, %c0_9, %c0_10, %c0_11] : memref<1x1x8x8xbf16, #tpu.memory_space<vmem>>, vector<1x1x8x8xbf16>
    %9 = vector.shape_cast %8 : vector<1x1x8x8xbf16> to vector<8x8xbf16>
    %c0_12 = arith.constant 0 : index
    %c0_13 = arith.constant 0 : index
    %c0_14 = arith.constant 0 : index
    %10 = vector.load %arg7[%c0_12, %c0_13, %c0_14] : memref<1x8x8xbf16, #tpu.memory_space<vmem>>, vector<1x8x8xbf16>
    %11 = vector.shape_cast %10 : vector<1x8x8xbf16> to vector<8x8xbf16>
    %cst_15 = arith.constant dense<0.000000e+00> : vector<8x8xf32>
    %12 = tpu.matmul %9, %11, %cst_15 {dimension_numbers = #tpu.dot_dimension_numbers<[1], [1], [0], [0], [0, 0, 1, 0], [], []>} : vector<8x8xbf16>, vector<8x8xbf16>, vector<8x8xf32> -> vector<8x8xf32>
    %13 = arith.addf %7, %12 : vector<8x8xf32>
    %c0_16 = arith.constant 0 : index
    %c0_17 = arith.constant 0 : index
    %c0_18 = arith.constant 0 : index
    %14 = vector.load %arg8[%c0_16, %c0_17, %c0_18] : memref<1x8x8xi8, #tpu.memory_space<vmem>>, vector<1x8x8xi8>
    %15 = vector.shape_cast %14 : vector<1x8x8xi8> to vector<8x8xi8>
    %c0_i8 = arith.constant 0 : i8
    %16 = vector.broadcast %c0_i8 : i8 to vector<8x8xi8>
    %17 = arith.cmpi ne, %15, %16 : vector<8x8xi8>
    %cst_19 = arith.constant -1.000000e+09 : f32
    %18 = vector.broadcast %cst_19 : f32 to vector<8x8xf32>
    %19 = arith.select %17, %18, %13 : vector<8x8xi1>, vector<8x8xf32>
    %cst_20 = arith.constant dense<0xFF800000> : vector<8xf32>
    %20 = vector.multi_reduction <maximumf>, %19, %cst_20 [1] : vector<8x8xf32> to vector<8xf32>
    %21 = vector.shape_cast %20 : vector<8xf32> to vector<8x1xf32>
    %22 = vector.broadcast %21 : vector<8x1xf32> to vector<8x8xf32>
    %23 = arith.subf %19, %22 : vector<8x8xf32>
    %24 = math.exp %23 : vector<8x8xf32>
    %cst_21 = arith.constant dense<0.000000e+00> : vector<8xf32>
    %25 = vector.multi_reduction <add>, %24, %cst_21 [1] : vector<8x8xf32> to vector<8xf32>
    %26 = vector.shape_cast %25 : vector<8xf32> to vector<8x1xf32>
    %27 = tpu.reciprocal %26 {approx = true} : vector<8x1xf32> -> vector<8x1xf32>
    %28 = vector.broadcast %27 : vector<8x1xf32> to vector<8x8xf32>
    %29 = arith.mulf %24, %28 : vector<8x8xf32>
    %c0_22 = arith.constant 0 : index
    %c0_23 = arith.constant 0 : index
    %c0_24 = arith.constant 0 : index
    %c0_25 = arith.constant 0 : index
    %30 = vector.load %arg12[%c0_22, %c0_23, %c0_24, %c0_25] : memref<1x1x8x8xf32, #tpu.memory_space<vmem>>, vector<1x1x8x8xf32>
    %31 = vector.shape_cast %30 : vector<1x1x8x8xf32> to vector<8x8xf32>
    %32 = vector.shape_cast %29 : vector<8x8xf32> to vector<1x1x8x8xf32>
    tpu.vector_store %arg12[%c0_22, %c0_23, %c0_24, %c0_25], %32 {strides = array<i32>} : memref<1x1x8x8xf32, #tpu.memory_space<vmem>>, vector<1x1x8x8xf32>,
    %33 = arith.truncf %29 : vector<8x8xf32> to vector<8x8xbf16>
    %c0_26 = arith.constant 0 : index
    %c0_27 = arith.constant 0 : index
    %c0_28 = arith.constant 0 : index
    %c0_29 = arith.constant 0 : index
    %34 = vector.load %arg6[%c0_26, %c0_27, %c0_28, %c0_29] : memref<1x1x8x8xbf16, #tpu.memory_space<vmem>>, vector<1x1x8x8xbf16>
    %35 = vector.shape_cast %34 : vector<1x1x8x8xbf16> to vector<8x8xbf16>
    %cst_30 = arith.constant dense<0.000000e+00> : vector<8x8xf32>
    %36 = tpu.matmul %33, %35, %cst_30 {dimension_numbers = #tpu.dot_dimension_numbers<[1], [0], [0], [1], [0, 0, 1, 1], [], []>} : vector<8x8xbf16>, vector<8x8xbf16>, vector<8x8xf32> -> vector<8x8xf32>
    %c0_31 = arith.constant 0 : index
    %c0_32 = arith.constant 0 : index
    %37 = vector.load %arg13[%c0_31, %c0_32] : memref<8x32xf32, #tpu.memory_space<vmem>>, vector<8x32xf32>
    %38 = arith.truncf %36 : vector<8x8xf32> to vector<8x8xbf16>
    %c0_33 = arith.constant 0 : index
    %c0_34 = arith.constant 0 : index
    %c0_35 = arith.constant 0 : index
    %39 = vector.load %arg9[%c0_33, %c0_34, %c0_35] : memref<1x8x32xbf16, #tpu.memory_space<vmem>>, vector<1x8x32xbf16>
    %40 = vector.shape_cast %39 : vector<1x8x32xbf16> to vector<8x32xbf16>
    %cst_36 = arith.constant dense<0.000000e+00> : vector<8x32xf32>
    %41 = tpu.matmul %38, %40, %cst_36 {dimension_numbers = #tpu.dot_dimension_numbers<[1], [0], [0], [1], [0, 0, 1, 1], [], []>} : vector<8x8xbf16>, vector<8x32xbf16>, vector<8x32xf32> -> vector<8x32xf32>
    %42 = arith.addf %37, %41 : vector<8x32xf32>
    %c0_37 = arith.constant 0 : index
    %c0_38 = arith.constant 0 : index
    %43 = vector.load %arg13[%c0_37, %c0_38] : memref<8x32xf32, #tpu.memory_space<vmem>>, vector<8x32xf32>
    tpu.vector_store %arg13[%c0_37, %c0_38], %42 {strides = array<i32>} : memref<8x32xf32, #tpu.memory_space<vmem>>, vector<8x32xf32>,
    %c3_i32 = arith.constant 3 : i32
    %44 = arith.cmpi eq, %arg2, %c3_i32 : i32
    %45 = arith.extui %44 : i1 to i32
    %c0_i32_39 = arith.constant 0 : i32
    %46 = arith.cmpi ne, %45, %c0_i32_39 : i32
    scf.if %46 {
      %c0_40 = arith.constant 0 : index
      %c0_41 = arith.constant 0 : index
      %47 = vector.load %arg13[%c0_40, %c0_41] : memref<8x32xf32, #tpu.memory_space<vmem>>, vector<8x32xf32>
      %c0_42 = arith.constant 0 : index
      %c0_43 = arith.constant 0 : index
      %48 = vector.load %arg10[%c0_42, %c0_43] : memref<1x32xf32, #tpu.memory_space<vmem>>, vector<1x32xf32>
      %49 = vector.broadcast %48 : vector<1x32xf32> to vector<8x32xf32>
      %50 = arith.addf %47, %49 : vector<8x32xf32>
      %c0_44 = arith.constant 0 : index
      %c0_45 = arith.constant 0 : index
      %c0_46 = arith.constant 0 : index
      %51 = vector.load %arg11[%c0_44, %c0_45, %c0_46] : memref<1x8x32xf32, #tpu.memory_space<vmem>>, vector<1x8x32xf32>
      %52 = vector.shape_cast %51 : vector<1x8x32xf32> to vector<8x32xf32>
      %53 = vector.shape_cast %50 : vector<8x32xf32> to vector<1x8x32xf32>
      tpu.vector_store %arg11[%c0_44, %c0_45, %c0_46], %53 {strides = array<i32>} : memref<1x8x32xf32, #tpu.memory_space<vmem>>, vector<1x8x32xf32>,
    } else {
    }
    return
  }
  func.func @transform_0(%arg0: i32, %arg1: i32, %arg2: i32) -> (i32, i32, i32, i32) {
    %c0_i32 = arith.constant 0 : i32
    %c0_i32_0 = arith.constant 0 : i32
    return %arg0, %arg2, %arg1, %c0_i32 : i32, i32, i32, i32
  }
  func.func @transform_1(%arg0: i32, %arg1: i32, %arg2: i32) -> (i32, i32, i32, i32) {
    %c0_i32 = arith.constant 0 : i32
    %c0_i32_0 = arith.constant 0 : i32
    return %arg0, %arg2, %arg1, %c0_i32 : i32, i32, i32, i32
  }
  func.func @transform_2(%arg0: i32, %arg1: i32, %arg2: i32) -> (i32, i32, i32, i32) {
    %c0_i32 = arith.constant 0 : i32
    %c0_i32_0 = arith.constant 0 : i32
    %c0_i32_1 = arith.constant 0 : i32
    return %arg0, %arg2, %c0_i32, %c0_i32_0 : i32, i32, i32, i32
  }
  func.func @transform_3(%arg0: i32, %arg1: i32, %arg2: i32) -> (i32, i32, i32, i32) {
    %c0_i32 = arith.constant 0 : i32
    %c0_i32_0 = arith.constant 0 : i32
    %c0_i32_1 = arith.constant 0 : i32
    return %arg0, %arg2, %c0_i32, %c0_i32_0 : i32, i32, i32, i32
  }
  func.func @transform_4(%arg0: i32, %arg1: i32, %arg2: i32) -> (i32, i32, i32) {
    %c4_i32 = arith.constant 4 : i32
    %0 = arith.muli %arg0, %c4_i32 : i32
    %c2_i32 = arith.constant 2 : i32
    %1 = arith.addi %c2_i32, %0 : i32
    %2 = arith.addi %1, %arg2 : i32
    %c5_i32 = arith.constant 5 : i32
    %c0_i32 = arith.constant 0 : i32
    %3 = arith.cmpi eq, %c5_i32, %c0_i32 : i32
    %c1_i32 = arith.constant 1 : i32
    %4 = arith.select %3, %c1_i32, %c5_i32 : i32
    %5 = arith.remsi %2, %4 : i32
    %c0_i32_0 = arith.constant 0 : i32
    %6 = arith.cmpi ne, %5, %c0_i32_0 : i32
    %c0_i32_1 = arith.constant 0 : i32
    %7 = arith.cmpi slt, %5, %c0_i32_1 : i32
    %c0_i32_2 = arith.constant 0 : i32
    %8 = arith.cmpi slt, %4, %c0_i32_2 : i32
    %9 = arith.xori %7, %8 : i1
    %10 = arith.andi %9, %6 : i1
    %11 = arith.addi %5, %4 : i32
    %12 = arith.select %10, %11, %5 : i32
    %c1_i32_3 = arith.constant 1 : i32
    %13 = arith.subi %12, %c1_i32_3 : i32
    %c0_i32_4 = arith.constant 0 : i32
    %14 = arith.maxsi %13, %c0_i32_4 : i32
    %c0_i32_5 = arith.constant 0 : i32
    %c0_i32_6 = arith.constant 0 : i32
    %c0_i32_7 = arith.constant 0 : i32
    return %14, %c0_i32_5, %c0_i32_6 : i32, i32, i32
  }
  func.func @transform_5(%arg0: i32, %arg1: i32, %arg2: i32) -> (i32, i32, i32) {
    %c0_i32 = arith.constant 0 : i32
    %c0_i32_0 = arith.constant 0 : i32
    return %arg0, %arg1, %c0_i32 : i32, i32, i32
  }
  func.func @transform_6(%arg0: i32, %arg1: i32, %arg2: i32) -> (i32, i32, i32) {
    %c0_i32 = arith.constant 0 : i32
    %c0_i32_0 = arith.constant 0 : i32
    %c0_i32_1 = arith.constant 0 : i32
    return %arg2, %c0_i32, %c0_i32_0 : i32, i32, i32
  }
  func.func @transform_7(%arg0: i32, %arg1: i32, %arg2: i32) -> (i32, i32) {
    %c0_i32 = arith.constant 0 : i32
    %c0_i32_0 = arith.constant 0 : i32
    %c0_i32_1 = arith.constant 0 : i32
    return %c0_i32, %c0_i32_0 : i32, i32
  }
  func.func @transform_8(%arg0: i32, %arg1: i32, %arg2: i32) -> (i32, i32, i32) {
    %c0_i32 = arith.constant 0 : i32
    %c0_i32_0 = arith.constant 0 : i32
    return %arg0, %arg1, %c0_i32 : i32, i32, i32
  }
  func.func @transform_9(%arg0: i32, %arg1: i32, %arg2: i32) -> (i32, i32, i32, i32) {
    %c0_i32 = arith.constant 0 : i32
    %c0_i32_0 = arith.constant 0 : i32
    return %arg0, %arg2, %arg1, %c0_i32 : i32, i32, i32, i32
  }
}

</mosaic_0001>

<llo_original>
// kernel: multi_head_attention.8
$region0: #{multi_head_attention.8}
  #allocation0 [shape = 'u32[]', space=smem, size = 0x4, offset = 0x4, fixed_abs, tag = 'smem constant byte address 0x4 - core index']
  #allocation1 [shape = 'u32[72,128]{1,0:T(1,128)}', space=vmem, size = 0x9000, scoped, tag = 'internal scratch']
  #allocation2 [shape = 'f32[8,32]{1,0:T(8,128)}', space=vmem, size = 0x1000, scoped, tag = 'scratch operand']
  %s0 = inlined_call_operand.vmem [shape: f32[8,32], index: 0, kind: input, shape index: {}]
  %s1 = inlined_call_operand.hbm [shape: f32[32,32], index: 1, kind: input, shape index: {}]
  %s2 = inlined_call_operand.vmem [shape: f32[1,32], index: 2, kind: input, shape index: {}]
  %s3 = inlined_call_operand.vmem [shape: bf16[8,32], index: 3, kind: output, shape index: {}]
  %s4 = sld [smem:[#allocation0]]
  $region34: #{multi_head_attention.8} parent=0
    _
  %s6 = ssub.s32 1, %s4
  %s7 = scalar_select 0, %s6, %s4
  $region1: #{multi_head_attention.8} parent=0
    #allocation3 [shape = 'u8[16384]{0}', space=vmem, size = 0x4000, scoped, tag = 'input window, operand 1, single buffered']
    #allocation4 [shape = 's32[1]{0}', space=sflag, size = 0x4, scoped, tag = 'scoped memory for multi_head_attention.8']
    %8 = vsyncpa [#allocation4], 0
    // Predicated region
    $region2: #{multi_head_attention.8} parent=1 // pred_check
      _
    $region3: #{multi_head_attention.8} parent=1 // pred_check_branch
      %10 = sbr.rel (0) target = $region5
    $region4: #{multi_head_attention.8} parent=1 // pred_region
      _
    $region5: #{multi_head_attention.8} parent=1 // pred_fallthru
      _
    // Predicated region
    $region6: #{multi_head_attention.8} parent=1 // pred_check
      _
    $region7: #{multi_head_attention.8} parent=1 // pred_check_branch
      %12 = sbr.rel (0) target = $region9
    $region8: #{multi_head_attention.8} parent=1 // pred_region
      %14 = vsyncadd [#allocation4], 0
      %s15 = sshll.u32 %s1, 4
      %s16 = int_to_ptr.hbm [resolvable:$true] %s15
      %s17 = sshll.u32 [#allocation3], 4
      %s18 = int_to_ptr.vmem [resolvable:$true] %s17
      %23 = dma.hbm_to_vmem [thread:$0]  %s16, 512, %s18, [#allocation4], 128, 128, 8
    $region9: #{multi_head_attention.8} parent=1 // pred_fallthru
      _
    // Predicated region
    $region10: #{multi_head_attention.8} parent=1 // pred_check
      _
    $region11: #{multi_head_attention.8} parent=1 // pred_check_branch
      %25 = sbr.rel (0) target = $region13
    $region12: #{multi_head_attention.8} parent=1 // pred_region
      _
    $region13: #{multi_head_attention.8} parent=1 // pred_fallthru
      _
    // Predicated region
    $region14: #{multi_head_attention.8} parent=1 // pred_check
      _
    $region15: #{multi_head_attention.8} parent=1 // pred_check_branch
      %27 = sbr.rel (0) target = $region17
    $region16: #{multi_head_attention.8} parent=1 // pred_region
      %29 = dma.done [#allocation4], 512
    $region17: #{multi_head_attention.8} parent=1 // pred_fallthru
      _
    %p31 = scmp.eq.s32.totalorder 0, 0
    // Predicated region
    $region18: #{multi_head_attention.8} parent=1 // pred_check
      %p32 = pneg %p31
    $region19: #{multi_head_attention.8} parent=1 // pred_check_branch
      %34 = sbr.rel (%p32) target = $region21
    $region20: #{multi_head_attention.8} parent=1 // pred_region
      %vm35 = vcmask 261120
      %36 = vst.msk [vmem:[#allocation2] sm:$0xff] %vm35, 0.0
    $region21: #{multi_head_attention.8} parent=1 // pred_fallthru
      _
    %v37 = vld [vmem:[#allocation2] sm:$0xff]
    %v38 = vld [vmem:[%s0] sm:$0xff]
    %v39 = vpack.c.bf16 %v38, %v38
    %v40 = vld [vmem:[#allocation3] sm:$0xff]
    %v41 = vld [vmem:[#allocation3 + $0x8] sm:$0xff]
    %v42 = vld [vmem:[#allocation3 + $0x10] sm:$0xff]
    %v43 = vld [vmem:[#allocation3 + $0x18] sm:$0xff]
    %v44 = vpack.c.bf16 %v41, %v40
    %v45 = vpack.c.bf16 %v43, %v42
    %vm46 = vcmask 261120
    %v48 = vsel %vm46, %v39, 0
    %50 = vmatpush.bf16.msra.mxu0 0
    %51 = vmatpush.bf16.msra.mxu0 0
    %52 = vmatpush.bf16.msra.mxu0 0
    %53 = vmatpush.bf16.msra.mxu0 0
    %54 = vmatpush.bf16.msra.mxu0 0
    %55 = vmatpush.bf16.msra.mxu0 0
    %56 = vmatpush.bf16.msra.mxu0 %v45
    %57 = vmatpush.bf16.msra.mxu0 %v44
    %58 = vmatmul.bf16.gmra.mxu0 %v48
    %v59 = vpop.f32.mrf.mxu0
    %v60 = vadd.f32 0.0, %v59
    %v61 = vpop.f32.mrf.mxu0
    %62 = vdwg.mxu0
    %v63 = vadd.f32 %v37, %v60
    %64 = vst.msk [vmem:[#allocation2] sm:$0xff] %vm46, %v63
    // Predicated region
    $region22: #{multi_head_attention.8} parent=1 // pred_check
      %p65 = pneg %p31
    $region23: #{multi_head_attention.8} parent=1 // pred_check_branch
      %67 = sbr.rel (%p65) target = $region25
    $region24: #{multi_head_attention.8} parent=1 // pred_region
      %v68 = vld [vmem:[#allocation2] sm:$0xff]
      %v69 = vld [vmem:[%s2] sm:$0x1]
      %v71 = vperm.slane %v69, 0
      %v73 = vadd.f32 %v68, %v71
      %v74 = vpack.c.bf16 %v73, %v73
      %vm75 = vcmask 257024
      %76 = vst.msk [vmem:[%s3] sm:$0xf] %vm75, %v74
    $region25: #{multi_head_attention.8} parent=1 // pred_fallthru
      _
    // Predicated region
    $region26: #{multi_head_attention.8} parent=1 // pred_check
      _
    $region27: #{multi_head_attention.8} parent=1 // pred_check_branch
      %78 = sbr.rel (0) target = $region29
    $region28: #{multi_head_attention.8} parent=1 // pred_region
      _
    $region29: #{multi_head_attention.8} parent=1 // pred_fallthru
      _
    // Predicated region
    $region30: #{multi_head_attention.8} parent=1 // pred_check
      _
    $region31: #{multi_head_attention.8} parent=1 // pred_check_branch
      %80 = sbr.rel (0) target = $region33
    $region32: #{multi_head_attention.8} parent=1 // pred_region
      _
    $region33: #{multi_head_attention.8} parent=1 // pred_fallthru
      _
    %81 = vsyncpa [#allocation4], 1

// kernel: multi_head_attention.6
$region0: #{multi_head_attention.6}
  #allocation0 [shape = 'u32[]', space=smem, size = 0x4, offset = 0x4, fixed_abs, tag = 'smem constant byte address 0x4 - core index']
  #allocation1 [shape = 'u32[72,128]{1,0:T(1,128)}', space=vmem, size = 0x9000, scoped, tag = 'internal scratch']
  #allocation2 [shape = 'f32[16,32]{1,0:T(8,128)}', space=vmem, size = 0x2000, scoped, tag = 'scratch operand']
  %s0 = inlined_call_operand.vmem [shape: f32[16,32], index: 0, kind: input, shape index: {}]
  %s1 = inlined_call_operand.vmem [shape: f32[32,32], index: 1, kind: input, shape index: {}]
  %s2 = inlined_call_operand.hbm [shape: f32[1,32], index: 2, kind: input, shape index: {}]
  %s3 = inlined_call_operand.vmem [shape: bf16[16,32], index: 3, kind: output, shape index: {}]
  %s4 = sld [smem:[#allocation0]]
  $region34: #{multi_head_attention.6} parent=0
    _
  %s6 = ssub.s32 1, %s4
  %s7 = scalar_select 0, %s6, %s4
  $region1: #{multi_head_attention.6} parent=0
    #allocation3 [shape = 'u8[512]{0}', space=vmem, size = 0x400, scoped, tag = 'input window, operand 2, single buffered']
    #allocation4 [shape = 's32[1]{0}', space=sflag, size = 0x4, scoped, tag = 'scoped memory for multi_head_attention.6']
    %8 = vsyncpa [#allocation4], 0
    // Predicated region
    $region2: #{multi_head_attention.6} parent=1 // pred_check
      _
    $region3: #{multi_head_attention.6} parent=1 // pred_check_branch
      %10 = sbr.rel (0) target = $region5
    $region4: #{multi_head_attention.6} parent=1 // pred_region
      _
    $region5: #{multi_head_attention.6} parent=1 // pred_fallthru
      _
    // Predicated region
    $region6: #{multi_head_attention.6} parent=1 // pred_check
      _
    $region7: #{multi_head_attention.6} parent=1 // pred_check_branch
      %12 = sbr.rel (0) target = $region9
    $region8: #{multi_head_attention.6} parent=1 // pred_region
      _
    $region9: #{multi_head_attention.6} parent=1 // pred_fallthru
      _
    // Predicated region
    $region10: #{multi_head_attention.6} parent=1 // pred_check
      _
    $region11: #{multi_head_attention.6} parent=1 // pred_check_branch
      %14 = sbr.rel (0) target = $region13
    $region12: #{multi_head_attention.6} parent=1 // pred_region
      %16 = vsyncadd [#allocation4], 0
      %s18 = sshll.u32 %s2, 4
      %s19 = int_to_ptr.hbm [resolvable:$true] %s18
      %s20 = sshll.u32 [#allocation3], 4
      %s21 = int_to_ptr.vmem [resolvable:$true] %s20
      %23 = dma.hbm_to_vmem [thread:$0]  %s19, 16, %s21, [#allocation4]
    $region13: #{multi_head_attention.6} parent=1 // pred_fallthru
      _
    // Predicated region
    $region14: #{multi_head_attention.6} parent=1 // pred_check
      _
    $region15: #{multi_head_attention.6} parent=1 // pred_check_branch
      %25 = sbr.rel (0) target = $region17
    $region16: #{multi_head_attention.6} parent=1 // pred_region
      %27 = dma.done [#allocation4], 16
    $region17: #{multi_head_attention.6} parent=1 // pred_fallthru
      _
    %p29 = scmp.eq.s32.totalorder 0, 0
    // Predicated region
    $region18: #{multi_head_attention.6} parent=1 // pred_check
      %p30 = pneg %p29
    $region19: #{multi_head_attention.6} parent=1 // pred_check_branch
      %32 = sbr.rel (%p30) target = $region21
    $region20: #{multi_head_attention.6} parent=1 // pred_region
      %vm33 = vcmask 261120
      %34 = vst.msk [vmem:[#allocation2] sm:$0xff] %vm33, 0.0
      %35 = vst.msk [vmem:[#allocation2 + $0x8] sm:$0xff] %vm33, 0.0
    $region21: #{multi_head_attention.6} parent=1 // pred_fallthru
      _
    %v36 = vld [vmem:[#allocation2] sm:$0xff]
    %v37 = vld [vmem:[#allocation2 + $0x8] sm:$0xff]
    %v38 = vld [vmem:[%s0] sm:$0xff]
    %v39 = vld [vmem:[%s0 + $0x8] sm:$0xff]
    %v40 = vpack.c.bf16 %v39, %v38
    %v41 = vld [vmem:[%s1] sm:$0xff]
    %v42 = vld [vmem:[%s1 + $0x8] sm:$0xff]
    %v43 = vld [vmem:[%s1 + $0x10] sm:$0xff]
    %v44 = vld [vmem:[%s1 + $0x18] sm:$0xff]
    %v45 = vpack.c.bf16 %v42, %v41
    %v46 = vpack.c.bf16 %v44, %v43
    %vm47 = vcmask 261120
    %v49 = vsel %vm47, %v40, 0
    %51 = vmatpush.bf16.msra.mxu0 0
    %52 = vmatpush.bf16.msra.mxu0 0
    %53 = vmatpush.bf16.msra.mxu0 0
    %54 = vmatpush.bf16.msra.mxu0 0
    %55 = vmatpush.bf16.msra.mxu0 0
    %56 = vmatpush.bf16.msra.mxu0 0
    %57 = vmatpush.bf16.msra.mxu0 %v46
    %58 = vmatpush.bf16.msra.mxu0 %v45
    %59 = vmatmul.bf16.gmra.mxu0 %v49
    %v60 = vpop.f32.mrf.mxu0
    %v61 = vadd.f32 0.0, %v60
    %v62 = vpop.f32.mrf.mxu0
    %v63 = vadd.f32 0.0, %v62
    %64 = vdwg.mxu0
    %v65 = vadd.f32 %v36, %v61
    %v66 = vadd.f32 %v37, %v63
    %67 = vst.msk [vmem:[#allocation2] sm:$0xff] %vm47, %v65
    %68 = vst.msk [vmem:[#allocation2 + $0x8] sm:$0xff] %vm47, %v66
    // Predicated region
    $region22: #{multi_head_attention.6} parent=1 // pred_check
      %p69 = pneg %p29
    $region23: #{multi_head_attention.6} parent=1 // pred_check_branch
      %71 = sbr.rel (%p69) target = $region25
    $region24: #{multi_head_attention.6} parent=1 // pred_region
      %v72 = vld [vmem:[#allocation2] sm:$0xff]
      %v73 = vld [vmem:[#allocation2 + $0x8] sm:$0xff]
      %v74 = vld [vmem:[#allocation3] sm:$0x1]
      %v76 = vperm.slane %v74, 0
      %v78 = vadd.f32 %v72, %v76
      %v79 = vadd.f32 %v73, %v76
      %v80 = vpack.c.bf16 %v78, %v78
      %v81 = vpack.c.bf16 %v79, %v79
      %vm82 = vcmask 257024
      %83 = vst.msk [vmem:[%s3] sm:$0xf] %vm82, %v80
      %84 = vst.msk [vmem:[%s3 + $0x4] sm:$0xf] %vm82, %v81
    $region25: #{multi_head_attention.6} parent=1 // pred_fallthru
      _
    // Predicated region
    $region26: #{multi_head_attention.6} parent=1 // pred_check
      _
    $region27: #{multi_head_attention.6} parent=1 // pred_check_branch
      %86 = sbr.rel (0) target = $region29
    $region28: #{multi_head_attention.6} parent=1 // pred_region
      _
    $region29: #{multi_head_attention.6} parent=1 // pred_fallthru
      _
    // Predicated region
    $region30: #{multi_head_attention.6} parent=1 // pred_check
      _
    $region31: #{multi_head_attention.6} parent=1 // pred_check_branch
      %88 = sbr.rel (0) target = $region33
    $region32: #{multi_head_attention.6} parent=1 // pred_region
      _
    $region33: #{multi_head_attention.6} parent=1 // pred_fallthru
      _
    %89 = vsyncpa [#allocation4], 1

// kernel: multi_head_attention.7
$region0: #{multi_head_attention.7}
  #allocation0 [shape = 'u32[]', space=smem, size = 0x4, offset = 0x4, fixed_abs, tag = 'smem constant byte address 0x4 - core index']
  #allocation1 [shape = 'u32[72,128]{1,0:T(1,128)}', space=vmem, size = 0x9000, scoped, tag = 'internal scratch']
  #allocation2 [shape = 'f32[16,32]{1,0:T(8,128)}', space=vmem, size = 0x2000, scoped, tag = 'scratch operand']
  %s0 = inlined_call_operand.hbm [shape: f32[16,32], index: 0, kind: input, shape index: {}]
  %s1 = inlined_call_operand.vmem [shape: f32[32,32], index: 1, kind: input, shape index: {}]
  %s2 = inlined_call_operand.vmem [shape: f32[1,32], index: 2, kind: input, shape index: {}]
  %s3 = inlined_call_operand.vmem [shape: bf16[16,32], index: 3, kind: output, shape index: {}]
  %s4 = sld [smem:[#allocation0]]
  $region34: #{multi_head_attention.7} parent=0
    _
  %s6 = ssub.s32 1, %s4
  %s7 = scalar_select 0, %s6, %s4
  $region1: #{multi_head_attention.7} parent=0
    #allocation3 [shape = 'u8[8192]{0}', space=vmem, size = 0x2000, scoped, tag = 'input window, operand 0, single buffered']
    #allocation4 [shape = 's32[1]{0}', space=sflag, size = 0x4, scoped, tag = 'scoped memory for multi_head_attention.7']
    %8 = vsyncpa [#allocation4], 0
    // Predicated region
    $region2: #{multi_head_attention.7} parent=1 // pred_check
      _
    $region3: #{multi_head_attention.7} parent=1 // pred_check_branch
      %10 = sbr.rel (0) target = $region5
    $region4: #{multi_head_attention.7} parent=1 // pred_region
      %12 = vsyncadd [#allocation4], 0
      %s13 = sshll.u32 %s0, 4
      %s14 = int_to_ptr.hbm [resolvable:$true] %s13
      %s15 = sshll.u32 [#allocation3], 4
      %s16 = int_to_ptr.vmem [resolvable:$true] %s15
      %21 = dma.hbm_to_vmem [thread:$0]  %s14, 256, %s16, [#allocation4], 128, 128, 8
    $region5: #{multi_head_attention.7} parent=1 // pred_fallthru
      _
    // Predicated region
    $region6: #{multi_head_attention.7} parent=1 // pred_check
      _
    $region7: #{multi_head_attention.7} parent=1 // pred_check_branch
      %23 = sbr.rel (0) target = $region9
    $region8: #{multi_head_attention.7} parent=1 // pred_region
      _
    $region9: #{multi_head_attention.7} parent=1 // pred_fallthru
      _
    // Predicated region
    $region10: #{multi_head_attention.7} parent=1 // pred_check
      _
    $region11: #{multi_head_attention.7} parent=1 // pred_check_branch
      %25 = sbr.rel (0) target = $region13
    $region12: #{multi_head_attention.7} parent=1 // pred_region
      _
    $region13: #{multi_head_attention.7} parent=1 // pred_fallthru
      _
    // Predicated region
    $region14: #{multi_head_attention.7} parent=1 // pred_check
      _
    $region15: #{multi_head_attention.7} parent=1 // pred_check_branch
      %27 = sbr.rel (0) target = $region17
    $region16: #{multi_head_attention.7} parent=1 // pred_region
      %29 = dma.done [#allocation4], 256
    $region17: #{multi_head_attention.7} parent=1 // pred_fallthru
      _
    %p31 = scmp.eq.s32.totalorder 0, 0
    // Predicated region
    $region18: #{multi_head_attention.7} parent=1 // pred_check
      %p32 = pneg %p31
    $region19: #{multi_head_attention.7} parent=1 // pred_check_branch
      %34 = sbr.rel (%p32) target = $region21
    $region20: #{multi_head_attention.7} parent=1 // pred_region
      %vm35 = vcmask 261120
      %36 = vst.msk [vmem:[#allocation2] sm:$0xff] %vm35, 0.0
      %37 = vst.msk [vmem:[#allocation2 + $0x8] sm:$0xff] %vm35, 0.0
    $region21: #{multi_head_attention.7} parent=1 // pred_fallthru
      _
    %v38 = vld [vmem:[#allocation2] sm:$0xff]
    %v39 = vld [vmem:[#allocation2 + $0x8] sm:$0xff]
    %v40 = vld [vmem:[#allocation3] sm:$0xff]
    %v41 = vld [vmem:[#allocation3 + $0x8] sm:$0xff]
    %v42 = vpack.c.bf16 %v41, %v40
    %v43 = vld [vmem:[%s1] sm:$0xff]
    %v44 = vld [vmem:[%s1 + $0x8] sm:$0xff]
    %v45 = vld [vmem:[%s1 + $0x10] sm:$0xff]
    %v46 = vld [vmem:[%s1 + $0x18] sm:$0xff]
    %v47 = vpack.c.bf16 %v44, %v43
    %v48 = vpack.c.bf16 %v46, %v45
    %vm49 = vcmask 261120
    %v51 = vsel %vm49, %v42, 0
    %53 = vmatpush.bf16.msra.mxu0 0
    %54 = vmatpush.bf16.msra.mxu0 0
    %55 = vmatpush.bf16.msra.mxu0 0
    %56 = vmatpush.bf16.msra.mxu0 0
    %57 = vmatpush.bf16.msra.mxu0 0
    %58 = vmatpush.bf16.msra.mxu0 0
    %59 = vmatpush.bf16.msra.mxu0 %v48
    %60 = vmatpush.bf16.msra.mxu0 %v47
    %61 = vmatmul.bf16.gmra.mxu0 %v51
    %v62 = vpop.f32.mrf.mxu0
    %v63 = vadd.f32 0.0, %v62
    %v64 = vpop.f32.mrf.mxu0
    %v65 = vadd.f32 0.0, %v64
    %66 = vdwg.mxu0
    %v67 = vadd.f32 %v38, %v63
    %v68 = vadd.f32 %v39, %v65
    %69 = vst.msk [vmem:[#allocation2] sm:$0xff] %vm49, %v67
    %70 = vst.msk [vmem:[#allocation2 + $0x8] sm:$0xff] %vm49, %v68
    // Predicated region
    $region22: #{multi_head_attention.7} parent=1 // pred_check
      %p71 = pneg %p31
    $region23: #{multi_head_attention.7} parent=1 // pred_check_branch
      %73 = sbr.rel (%p71) target = $region25
    $region24: #{multi_head_attention.7} parent=1 // pred_region
      %v74 = vld [vmem:[#allocation2] sm:$0xff]
      %v75 = vld [vmem:[#allocation2 + $0x8] sm:$0xff]
      %v76 = vld [vmem:[%s2] sm:$0x1]
      %v78 = vperm.slane %v76, 0
      %v80 = vadd.f32 %v74, %v78
      %v81 = vadd.f32 %v75, %v78
      %v82 = vpack.c.bf16 %v80, %v80
      %v83 = vpack.c.bf16 %v81, %v81
      %vm84 = vcmask 257024
      %85 = vst.msk [vmem:[%s3] sm:$0xf] %vm84, %v82
      %86 = vst.msk [vmem:[%s3 + $0x4] sm:$0xf] %vm84, %v83
    $region25: #{multi_head_attention.7} parent=1 // pred_fallthru
      _
    // Predicated region
    $region26: #{multi_head_attention.7} parent=1 // pred_check
      _
    $region27: #{multi_head_attention.7} parent=1 // pred_check_branch
      %88 = sbr.rel (0) target = $region29
    $region28: #{multi_head_attention.7} parent=1 // pred_region
      _
    $region29: #{multi_head_attention.7} parent=1 // pred_fallthru
      _
    // Predicated region
    $region30: #{multi_head_attention.7} parent=1 // pred_check
      _
    $region31: #{multi_head_attention.7} parent=1 // pred_check_branch
      %90 = sbr.rel (0) target = $region33
    $region32: #{multi_head_attention.7} parent=1 // pred_region
      _
    $region33: #{multi_head_attention.7} parent=1 // pred_fallthru
      _
    %91 = vsyncpa [#allocation4], 1

// kernel: multi_head_attention.5
$region0: #{multi_head_attention.5}
  #allocation0 [shape = 'u32[]', space=smem, size = 0x4, offset = 0x4, fixed_abs, tag = 'smem constant byte address 0x4 - core index']
  #allocation1 [shape = 'u32[72,128]{1,0:T(1,128)}', space=vmem, size = 0x9000, scoped, tag = 'internal scratch']
  #allocation2 [shape = 'f32[16,32]{1,0:T(8,128)}', space=vmem, size = 0x2000, scoped, tag = 'scratch operand']
  %s0 = inlined_call_operand.hbm [shape: f32[16,32], index: 0, kind: input, shape index: {}]
  %s1 = inlined_call_operand.vmem [shape: f32[32,32], index: 1, kind: input, shape index: {}]
  %s2 = inlined_call_operand.hbm [shape: f32[1,32], index: 2, kind: input, shape index: {}]
  %s3 = inlined_call_operand.vmem [shape: bf16[16,32], index: 3, kind: output, shape index: {}]
  %s4 = sld [smem:[#allocation0]]
  $region38: #{multi_head_attention.5} parent=0
    _
  %s6 = ssub.s32 1, %s4
  %s7 = scalar_select 0, %s6, %s4
  $region1: #{multi_head_attention.5} parent=0
    #allocation3 [shape = 'u8[8192]{0}', space=vmem, size = 0x2000, scoped, tag = 'input window, operand 0, single buffered']
    #allocation4 [shape = 's32[1]{0}', space=sflag, size = 0x4, scoped, tag = 'scoped memory for multi_head_attention.5']
    #allocation5 [shape = 'u8[512]{0}', space=vmem, size = 0x400, scoped, tag = 'input window, operand 2, single buffered']
    #allocation6 [shape = 's32[1]{0}', space=sflag, size = 0x4, scoped, tag = 'scoped memory for multi_head_attention.5']
    %8 = vsyncpa [#allocation4], 0
    %9 = vsyncpa [#allocation6], 0
    // Predicated region
    $region2: #{multi_head_attention.5} parent=1 // pred_check
      _
    $region3: #{multi_head_attention.5} parent=1 // pred_check_branch
      %11 = sbr.rel (0) target = $region5
    $region4: #{multi_head_attention.5} parent=1 // pred_region
      %13 = vsyncadd [#allocation4], 0
      %s14 = sshll.u32 %s0, 4
      %s15 = int_to_ptr.hbm [resolvable:$true] %s14
      %s16 = sshll.u32 [#allocation3], 4
      %s17 = int_to_ptr.vmem [resolvable:$true] %s16
      %22 = dma.hbm_to_vmem [thread:$0]  %s15, 256, %s17, [#allocation4], 128, 128, 8
    $region5: #{multi_head_attention.5} parent=1 // pred_fallthru
      _
    // Predicated region
    $region6: #{multi_head_attention.5} parent=1 // pred_check
      _
    $region7: #{multi_head_attention.5} parent=1 // pred_check_branch
      %24 = sbr.rel (0) target = $region9
    $region8: #{multi_head_attention.5} parent=1 // pred_region
      _
    $region9: #{multi_head_attention.5} parent=1 // pred_fallthru
      _
    // Predicated region
    $region10: #{multi_head_attention.5} parent=1 // pred_check
      _
    $region11: #{multi_head_attention.5} parent=1 // pred_check_branch
      %26 = sbr.rel (0) target = $region13
    $region12: #{multi_head_attention.5} parent=1 // pred_region
      %28 = vsyncadd [#allocation6], 0
      %s30 = sshll.u32 %s2, 4
      %s31 = int_to_ptr.hbm [resolvable:$true] %s30
      %s32 = sshll.u32 [#allocation5], 4
      %s33 = int_to_ptr.vmem [resolvable:$true] %s32
      %35 = dma.hbm_to_vmem [thread:$0]  %s31, 16, %s33, [#allocation6]
    $region13: #{multi_head_attention.5} parent=1 // pred_fallthru
      _
    // Predicated region
    $region14: #{multi_head_attention.5} parent=1 // pred_check
      _
    $region15: #{multi_head_attention.5} parent=1 // pred_check_branch
      %37 = sbr.rel (0) target = $region17
    $region16: #{multi_head_attention.5} parent=1 // pred_region
      %39 = dma.done [#allocation4], 256
    $region17: #{multi_head_attention.5} parent=1 // pred_fallthru
      _
    // Predicated region
    $region18: #{multi_head_attention.5} parent=1 // pred_check
      _
    $region19: #{multi_head_attention.5} parent=1 // pred_check_branch
      %41 = sbr.rel (0) target = $region21
    $region20: #{multi_head_attention.5} parent=1 // pred_region
      %43 = dma.done [#allocation6], 16
    $region21: #{multi_head_attention.5} parent=1 // pred_fallthru
      _
    %p45 = scmp.eq.s32.totalorder 0, 0
    // Predicated region
    $region22: #{multi_head_attention.5} parent=1 // pred_check
      %p46 = pneg %p45
    $region23: #{multi_head_attention.5} parent=1 // pred_check_branch
      %48 = sbr.rel (%p46) target = $region25
    $region24: #{multi_head_attention.5} parent=1 // pred_region
      %vm49 = vcmask 261120
      %50 = vst.msk [vmem:[#allocation2] sm:$0xff] %vm49, 0.0
      %51 = vst.msk [vmem:[#allocation2 + $0x8] sm:$0xff] %vm49, 0.0
    $region25: #{multi_head_attention.5} parent=1 // pred_fallthru
      _
    %v52 = vld [vmem:[#allocation2] sm:$0xff]
    %v53 = vld [vmem:[#allocation2 + $0x8] sm:$0xff]
    %v54 = vld [vmem:[#allocation3] sm:$0xff]
    %v55 = vld [vmem:[#allocation3 + $0x8] sm:$0xff]
    %v56 = vpack.c.bf16 %v55, %v54
    %v57 = vld [vmem:[%s1] sm:$0xff]
    %v58 = vld [vmem:[%s1 + $0x8] sm:$0xff]
    %v59 = vld [vmem:[%s1 + $0x10] sm:$0xff]
    %v60 = vld [vmem:[%s1 + $0x18] sm:$0xff]
    %v61 = vpack.c.bf16 %v58, %v57
    %v62 = vpack.c.bf16 %v60, %v59
    %vm63 = vcmask 261120
    %v65 = vsel %vm63, %v56, 0
    %67 = vmatpush.bf16.msra.mxu0 0
    %68 = vmatpush.bf16.msra.mxu0 0
    %69 = vmatpush.bf16.msra.mxu0 0
    %70 = vmatpush.bf16.msra.mxu0 0
    %71 = vmatpush.bf16.msra.mxu0 0
    %72 = vmatpush.bf16.msra.mxu0 0
    %73 = vmatpush.bf16.msra.mxu0 %v62
    %74 = vmatpush.bf16.msra.mxu0 %v61
    %75 = vmatmul.bf16.gmra.mxu0 %v65
    %v76 = vpop.f32.mrf.mxu0
    %v77 = vadd.f32 0.0, %v76
    %v78 = vpop.f32.mrf.mxu0
    %v79 = vadd.f32 0.0, %v78
    %80 = vdwg.mxu0
    %v81 = vadd.f32 %v52, %v77
    %v82 = vadd.f32 %v53, %v79
    %83 = vst.msk [vmem:[#allocation2] sm:$0xff] %vm63, %v81
    %84 = vst.msk [vmem:[#allocation2 + $0x8] sm:$0xff] %vm63, %v82
    // Predicated region
    $region26: #{multi_head_attention.5} parent=1 // pred_check
      %p85 = pneg %p45
    $region27: #{multi_head_attention.5} parent=1 // pred_check_branch
      %87 = sbr.rel (%p85) target = $region29
    $region28: #{multi_head_attention.5} parent=1 // pred_region
      %v88 = vld [vmem:[#allocation2] sm:$0xff]
      %v89 = vld [vmem:[#allocation2 + $0x8] sm:$0xff]
      %v90 = vld [vmem:[#allocation5] sm:$0x1]
      %v92 = vperm.slane %v90, 0
      %v94 = vadd.f32 %v88, %v92
      %v95 = vadd.f32 %v89, %v92
      %v96 = vpack.c.bf16 %v94, %v94
      %v97 = vpack.c.bf16 %v95, %v95
      %vm98 = vcmask 257024
      %99 = vst.msk [vmem:[%s3] sm:$0xf] %vm98, %v96
      %100 = vst.msk [vmem:[%s3 + $0x4] sm:$0xf] %vm98, %v97
    $region29: #{multi_head_attention.5} parent=1 // pred_fallthru
      _
    // Predicated region
    $region30: #{multi_head_attention.5} parent=1 // pred_check
      _
    $region31: #{multi_head_attention.5} parent=1 // pred_check_branch
      %102 = sbr.rel (0) target = $region33
    $region32: #{multi_head_attention.5} parent=1 // pred_region
      _
    $region33: #{multi_head_attention.5} parent=1 // pred_fallthru
      _
    // Predicated region
    $region34: #{multi_head_attention.5} parent=1 // pred_check
      _
    $region35: #{multi_head_attention.5} parent=1 // pred_check_branch
      %104 = sbr.rel (0) target = $region37
    $region36: #{multi_head_attention.5} parent=1 // pred_region
      _
    $region37: #{multi_head_attention.5} parent=1 // pred_fallthru
      _
    %105 = vsyncpa [#allocation4], 1
    %106 = vsyncpa [#allocation6], 1

// kernel: multi_head_attention.9
$region0: #{multi_head_attention.9}
  #allocation0 [shape = 'u32[]', space=smem, size = 0x4, offset = 0x4, fixed_abs, tag = 'smem constant byte address 0x4 - core index']
  #allocation1 [shape = 'u32[72,128]{1,0:T(1,128)}', space=vmem, size = 0x9000, scoped, tag = 'internal scratch']
  #allocation2 [shape = 'f32[8,32]{1,0:T(8,128)}', space=vmem, size = 0x1000, scoped, tag = 'scratch operand']
  %s0 = inlined_call_operand.vmem [shape: bf16[2,4,8,8], index: 0, kind: input, shape index: {}]
  %s1 = inlined_call_operand.vmem [shape: bf16[2,4,8,8], index: 1, kind: input, shape index: {}]
  %s2 = inlined_call_operand.vmem [shape: bf16[2,4,8,8], index: 2, kind: input, shape index: {}]
  %s3 = inlined_call_operand.vmem [shape: bf16[2,4,8,8], index: 3, kind: input, shape index: {}]
  %s4 = inlined_call_operand.vmem [shape: bf16[4,8,8], index: 4, kind: input, shape index: {}]
  %s5 = inlined_call_operand.vmem [shape: s8[2,8,8], index: 5, kind: input, shape index: {}]
  %s6 = inlined_call_operand.vmem [shape: bf16[4,8,32], index: 6, kind: input, shape index: {}]
  %s7 = inlined_call_operand.vmem [shape: f32[1,32], index: 7, kind: input, shape index: {}]
  %s8 = inlined_call_operand.hbm [shape: f32[2,8,32], index: 8, kind: output, shape index: {0}]
  %s9 = inlined_call_operand.hbm [shape: f32[2,4,8,8], index: 9, kind: output, shape index: {1}]
  %10 = xla_tuple %s8, %s9
  %s11 = sld [smem:[#allocation0]]
  $region81: #{multi_head_attention.9} parent=0
    _
  %s13 = ssub.s32 1, %s11
  %s14 = scalar_select 0, %s13, %s11
  $region1: #{multi_head_attention.9} parent=0
    #allocation3 [shape = 'u8[8192]{0}', space=vmem, size = 0x2000, scoped, tag = 'output window, operand 0']
    #allocation4 [shape = 's32[2]{0}', space=sflag, size = 0x8, scoped, tag = 'scoped memory for multi_head_attention.9']
    #allocation5 [shape = 'u8[8192]{0}', space=vmem, size = 0x2000, scoped, tag = 'output window, operand 1']
    #allocation6 [shape = 's32[2]{0}', space=sflag, size = 0x8, scoped, tag = 'scoped memory for multi_head_attention.9']
    %15 = vsyncpa [#allocation4], 0
    %s16 = scalar_lea.sflag [#allocation4], 1
    %17 = vsyncpa %s16, 0
    %18 = vsyncpa [#allocation6], 0
    %s19 = scalar_lea.sflag [#allocation6], 1
    %20 = vsyncpa %s19, 0
    loop: start=0, step=1, limit=10
    $region2: #{multi_head_attention.9} parent=1 // loop_pre_header
      _
    $region3: #{multi_head_attention.9} parent=1 // loop_header
      %s22 = sphi 0, %s26
      %p23 = scmp.ge.s32.totalorder %s22, 10
      %s29 = sphi 0, %s48
      %s30 = sphi 0, %s44
      %s31 = sphi 0, %s40
      %s32 = sphi 0, %s29
      %s33 = sphi 0, %s30
      %s34 = sphi 0, %s31
      %s35 = sphi 0, %s32
      %s36 = sphi 0, %s33
      %s37 = sphi 0, %s34
      %s55 = sphi 0, %s57
      %s58 = sphi 0, %s55
      %s59 = sphi 0, %s58
      %s75 = sphi 0, %s59
      %s85 = sphi 0, %s87
      %s88 = sphi 0, %s85
      %s89 = sphi 0, %s88
      %s105 = sphi 0, %s89
      %s113 = sphi 0, %s115
      %s116 = sphi 0, %s113
      %s117 = sphi 0, %s116
      %s133 = sphi 0, %s117
      %s141 = sphi 0, %s143
      %s144 = sphi 0, %s141
      %s145 = sphi 0, %s144
      %s161 = sphi 0, %s145
      %s205 = sphi 0, %s207
      %s208 = sphi 0, %s205
      %s209 = sphi 0, %s208
      %s225 = sphi 0, %s209
      %s233 = sphi 0, %s235
      %s236 = sphi 0, %s233
      %s237 = sphi 0, %s236
      %s253 = sphi 0, %s237
      %s259 = sphi 0, %s261
      %s262 = sphi 0, %s259
      %s263 = sphi 0, %s262
      %s279 = sphi 0, %s263
      %s283 = sphi 0, %s283
      %s285 = sphi 0, %s283
      %s286 = sphi 0, %s285
      %s300 = sphi 0, %s286
      %s308 = sphi 0, %s310
      %s311 = sphi 0, %s308
      %s312 = sphi 0, %s311
      %s328 = sphi 0, %s312
      %s338 = sphi 0, %s340
      %s341 = sphi 0, %s338
      %s342 = sphi 0, %s341
      %s358 = sphi 0, %s342
    $region4: #{multi_head_attention.9} parent=1 // loop_header_branch
      %25 = sbr.rel (%p23) target = $region8
    $region5: #{multi_head_attention.9} parent=1 // loop_body
      %s27 = ssub.s32 %s22, 1
      %s28 = ssub.s32 %s22, 2
      %s38 = sadd.s32 1, %s31
      %p39 = scmp.ge.s32.totalorder %s38, 4
      %s40 = scalar_select %p39, 0, %s38
      %s41 = sadd.s32 1, %s30
      %s42 = scalar_select %p39, %s41, %s30
      %p43 = scmp.ge.s32.totalorder %s42, 1
      %s44 = scalar_select %p43, 0, %s42
      %s45 = sadd.s32 1, %s29
      %s46 = scalar_select %p43, %s45, %s29
      %p47 = scmp.ge.s32.totalorder %s46, 2
      %s48 = scalar_select %p47, 0, %s46
      %s49 = ssub.s32 %s29, %s48
      %s50 = ssub.s32 %s31, %s40
      %s51 = sor.u32 %s49, %s50
      %s52 = ssub.s32 %s30, %s44
      %s53 = sor.u32 %s51, %s52
      %p54 = scmp.eq.s32.totalorder %s53, 0
      %s56 = sadd.s32 %s55, 1
      %s57 = scalar_select %p54, %s55, %s56
      %p60 = pneg %p54
      %p61 = scmp.eq.s32.totalorder %s22, 7
      %p62 = por %p60, %p61
      %p63 = scmp.ne.s32.totalorder %s55, %s58
      %p64 = scmp.eq.s32.totalorder %s22, 0
      %p65 = por %p63, %p64
      %p66 = scmp.ne.s32.totalorder %s55, %s58
      %p67 = scmp.eq.s32.totalorder %s27, 7
      %p68 = por %p66, %p67
      %p69 = scmp.ne.s32.totalorder %s58, %s59
      %p70 = scmp.eq.s32.totalorder %s27, 0
      %p71 = por %p69, %p70
      %p72 = scmp.ne.s32.totalorder %s58, %s59
      %p73 = scmp.eq.s32.totalorder %s28, 7
      %p74 = por %p72, %p73
      %p76 = scmp.ne.s32.totalorder %s59, %s75
      %p77 = scmp.eq.s32.totalorder %s28, 0
      %p78 = por %p76, %p77
      %s79 = ssub.s32 %s29, %s48
      %s80 = ssub.s32 %s31, %s40
      %s81 = sor.u32 %s79, %s80
      %s82 = ssub.s32 %s30, %s44
      %s83 = sor.u32 %s81, %s82
      %p84 = scmp.eq.s32.totalorder %s83, 0
      %s86 = sadd.s32 %s85, 1
      %s87 = scalar_select %p84, %s85, %s86
      %p90 = pneg %p84
      %p91 = scmp.eq.s32.totalorder %s22, 7
      %p92 = por %p90, %p91
      %p93 = scmp.ne.s32.totalorder %s85, %s88
      %p94 = scmp.eq.s32.totalorder %s22, 0
      %p95 = por %p93, %p94
      %p96 = scmp.ne.s32.totalorder %s85, %s88
      %p97 = scmp.eq.s32.totalorder %s27, 7
      %p98 = por %p96, %p97
      %p99 = scmp.ne.s32.totalorder %s88, %s89
      %p100 = scmp.eq.s32.totalorder %s27, 0
      %p101 = por %p99, %p100
      %p102 = scmp.ne.s32.totalorder %s88, %s89
      %p103 = scmp.eq.s32.totalorder %s28, 7
      %p104 = por %p102, %p103
      %p106 = scmp.ne.s32.totalorder %s89, %s105
      %p107 = scmp.eq.s32.totalorder %s28, 0
      %p108 = por %p106, %p107
      %s109 = ssub.s32 %s29, %s48
      %s110 = ssub.s32 %s31, %s40
      %s111 = sor.u32 %s109, %s110
      %p112 = scmp.eq.s32.totalorder %s111, 0
      %s114 = sadd.s32 %s113, 1
      %s115 = scalar_select %p112, %s113, %s114
      %p118 = pneg %p112
      %p119 = scmp.eq.s32.totalorder %s22, 7
      %p120 = por %p118, %p119
      %p121 = scmp.ne.s32.totalorder %s113, %s116
      %p122 = scmp.eq.s32.totalorder %s22, 0
      %p123 = por %p121, %p122
      %p124 = scmp.ne.s32.totalorder %s113, %s116
      %p125 = scmp.eq.s32.totalorder %s27, 7
      %p126 = por %p124, %p125
      %p127 = scmp.ne.s32.totalorder %s116, %s117
      %p128 = scmp.eq.s32.totalorder %s27, 0
      %p129 = por %p127, %p128
      %p130 = scmp.ne.s32.totalorder %s116, %s117
      %p131 = scmp.eq.s32.totalorder %s28, 7
      %p132 = por %p130, %p131
      %p134 = scmp.ne.s32.totalorder %s117, %s133
      %p135 = scmp.eq.s32.totalorder %s28, 0
      %p136 = por %p134, %p135
      %s137 = ssub.s32 %s29, %s48
      %s138 = ssub.s32 %s31, %s40
      %s139 = sor.u32 %s137, %s138
      %p140 = scmp.eq.s32.totalorder %s139, 0
      %s142 = sadd.s32 %s141, 1
      %s143 = scalar_select %p140, %s141, %s142
      %p146 = pneg %p140
      %p147 = scmp.eq.s32.totalorder %s22, 7
      %p148 = por %p146, %p147
      %p149 = scmp.ne.s32.totalorder %s141, %s144
      %p150 = scmp.eq.s32.totalorder %s22, 0
      %p151 = por %p149, %p150
      %p152 = scmp.ne.s32.totalorder %s141, %s144
      %p153 = scmp.eq.s32.totalorder %s27, 7
      %p154 = por %p152, %p153
      %p155 = scmp.ne.s32.totalorder %s144, %s145
      %p156 = scmp.eq.s32.totalorder %s27, 0
      %p157 = por %p155, %p156
      %p158 = scmp.ne.s32.totalorder %s144, %s145
      %p159 = scmp.eq.s32.totalorder %s28, 7
      %p160 = por %p158, %p159
      %p162 = scmp.ne.s32.totalorder %s145, %s161
      %p163 = scmp.eq.s32.totalorder %s28, 0
      %p164 = por %p162, %p163
      %s165 = smul.u32 %s29, 4
      %s166 = sadd.s32 %s165, 2
      %s167 = sadd.s32 %s166, %s31
      %p168 = scmp.lt.s32.totalorder %s167, 0
      %s169 = ssub.s32 0, %s167
      %s170 = scalar_select %p168, %s169, %s167
      %s171 = sdiv.u32.pop %s170, 5
      %s172 = srem.u32.pop %s170, 5
      %s173 = ssub.s32 0, %s172
      %s174 = scalar_select %p168, %s173, %s172
      %p175 = scmp.ne.s32.totalorder %s174, 0
      %p176 = scmp.lt.s32.totalorder %s174, 0
      %p177 = pnand %p176, %p175
      %p178 = pneg %p177
      %s179 = sadd.s32 %s174, 5
      %s180 = scalar_select %p178, %s179, %s174
      %s181 = ssub.s32 %s180, 1
      %p182 = scmp.gt.s32.totalorder %s181, 0
      %s183 = scalar_select %p182, %s181, 0
      %s184 = smul.u32 %s48, 4
      %s185 = sadd.s32 %s184, 2
      %s186 = sadd.s32 %s185, %s40
      %p187 = scmp.lt.s32.totalorder %s186, 0
      %s188 = ssub.s32 0, %s186
      %s189 = scalar_select %p187, %s188, %s186
      %s190 = sdiv.u32.pop %s189, 5
      %s191 = srem.u32.pop %s189, 5
      %s192 = ssub.s32 0, %s191
      %s193 = scalar_select %p187, %s192, %s191
      %p194 = scmp.ne.s32.totalorder %s193, 0
      %p195 = scmp.lt.s32.totalorder %s193, 0
      %p196 = pnand %p195, %p194
      %p197 = pneg %p196
      %s198 = sadd.s32 %s193, 5
      %s199 = scalar_select %p197, %s198, %s193
      %s200 = ssub.s32 %s199, 1
      %p201 = scmp.gt.s32.totalorder %s200, 0
      %s202 = scalar_select %p201, %s200, 0
      %s203 = ssub.s32 %s183, %s202
      %p204 = scmp.eq.s32.totalorder %s203, 0
      %s206 = sadd.s32 %s205, 1
      %s207 = scalar_select %p204, %s205, %s206
      %p210 = pneg %p204
      %p211 = scmp.eq.s32.totalorder %s22, 7
      %p212 = por %p210, %p211
      %p213 = scmp.ne.s32.totalorder %s205, %s208
      %p214 = scmp.eq.s32.totalorder %s22, 0
      %p215 = por %p213, %p214
      %p216 = scmp.ne.s32.totalorder %s205, %s208
      %p217 = scmp.eq.s32.totalorder %s27, 7
      %p218 = por %p216, %p217
      %p219 = scmp.ne.s32.totalorder %s208, %s209
      %p220 = scmp.eq.s32.totalorder %s27, 0
      %p221 = por %p219, %p220
      %p222 = scmp.ne.s32.totalorder %s208, %s209
      %p223 = scmp.eq.s32.totalorder %s28, 7
      %p224 = por %p222, %p223
      %p226 = scmp.ne.s32.totalorder %s209, %s225
      %p227 = scmp.eq.s32.totalorder %s28, 0
      %p228 = por %p226, %p227
      %s229 = ssub.s32 %s29, %s48
      %s230 = ssub.s32 %s30, %s44
      %s231 = sor.u32 %s229, %s230
      %p232 = scmp.eq.s32.totalorder %s231, 0
      %s234 = sadd.s32 %s233, 1
      %s235 = scalar_select %p232, %s233, %s234
      %p238 = pneg %p232
      %p239 = scmp.eq.s32.totalorder %s22, 7
      %p240 = por %p238, %p239
      %p241 = scmp.ne.s32.totalorder %s233, %s236
      %p242 = scmp.eq.s32.totalorder %s22, 0
      %p243 = por %p241, %p242
      %p244 = scmp.ne.s32.totalorder %s233, %s236
      %p245 = scmp.eq.s32.totalorder %s27, 7
      %p246 = por %p244, %p245
      %p247 = scmp.ne.s32.totalorder %s236, %s237
      %p248 = scmp.eq.s32.totalorder %s27, 0
      %p249 = por %p247, %p248
      %p250 = scmp.ne.s32.totalorder %s236, %s237
      %p251 = scmp.eq.s32.totalorder %s28, 7
      %p252 = por %p250, %p251
      %p254 = scmp.ne.s32.totalorder %s237, %s253
      %p255 = scmp.eq.s32.totalorder %s28, 0
      %p256 = por %p254, %p255
      %s257 = ssub.s32 %s31, %s40
      %p258 = scmp.eq.s32.totalorder %s257, 0
      %s260 = sadd.s32 %s259, 1
      %s261 = scalar_select %p258, %s259, %s260
      %p264 = pneg %p258
      %p265 = scmp.eq.s32.totalorder %s22, 7
      %p266 = por %p264, %p265
      %p267 = scmp.ne.s32.totalorder %s259, %s262
      %p268 = scmp.eq.s32.totalorder %s22, 0
      %p269 = por %p267, %p268
      %p270 = scmp.ne.s32.totalorder %s259, %s262
      %p271 = scmp.eq.s32.totalorder %s27, 7
      %p272 = por %p270, %p271
      %p273 = scmp.ne.s32.totalorder %s262, %s263
      %p274 = scmp.eq.s32.totalorder %s27, 0
      %p275 = por %p273, %p274
      %p276 = scmp.ne.s32.totalorder %s262, %s263
      %p277 = scmp.eq.s32.totalorder %s28, 7
      %p278 = por %p276, %p277
      %p280 = scmp.ne.s32.totalorder %s263, %s279
      %p281 = scmp.eq.s32.totalorder %s28, 0
      %p282 = por %p280, %p281
      %s284 = sadd.s32 %s283, 1
      %p287 = scmp.eq.s32.totalorder %s22, 7
      %p288 = scmp.ne.s32.totalorder %s283, %s285
      %p289 = scmp.eq.s32.totalorder %s22, 0
      %p290 = por %p288, %p289
      %p291 = scmp.ne.s32.totalorder %s283, %s285
      %p292 = scmp.eq.s32.totalorder %s27, 7
      %p293 = por %p291, %p292
      %p294 = scmp.ne.s32.totalorder %s285, %s286
      %p295 = scmp.eq.s32.totalorder %s27, 0
      %p296 = por %p294, %p295
      %p297 = scmp.ne.s32.totalorder %s285, %s286
      %p298 = scmp.eq.s32.totalorder %s28, 7
      %p299 = por %p297, %p298
      %p301 = scmp.ne.s32.totalorder %s286, %s300
      %p302 = scmp.eq.s32.totalorder %s28, 0
      %p303 = por %p301, %p302
      %s304 = ssub.s32 %s29, %s48
      %s305 = ssub.s32 %s30, %s44
      %s306 = sor.u32 %s304, %s305
      %p307 = scmp.eq.s32.totalorder %s306, 0
      %s309 = sadd.s32 %s308, 1
      %s310 = scalar_select %p307, %s308, %s309
      %p313 = pneg %p307
      %p314 = scmp.eq.s32.totalorder %s22, 7
      %p315 = por %p313, %p314
      %p316 = scmp.ne.s32.totalorder %s308, %s311
      %p317 = scmp.eq.s32.totalorder %s22, 0
      %p318 = por %p316, %p317
      %p319 = scmp.ne.s32.totalorder %s308, %s311
      %p320 = scmp.eq.s32.totalorder %s27, 7
      %p321 = por %p319, %p320
      %p322 = scmp.ne.s32.totalorder %s311, %s312
      %p323 = scmp.eq.s32.totalorder %s27, 0
      %p324 = por %p322, %p323
      %p325 = scmp.ne.s32.totalorder %s311, %s312
      %p326 = scmp.eq.s32.totalorder %s28, 7
      %p327 = por %p325, %p326
      %p329 = scmp.ne.s32.totalorder %s312, %s328
      %p330 = scmp.eq.s32.totalorder %s28, 0
      %p331 = por %p329, %p330
      %s332 = ssub.s32 %s29, %s48
      %s333 = ssub.s32 %s31, %s40
      %s334 = sor.u32 %s332, %s333
      %s335 = ssub.s32 %s30, %s44
      %s336 = sor.u32 %s334, %s335
      %p337 = scmp.eq.s32.totalorder %s336, 0
      %s339 = sadd.s32 %s338, 1
      %s340 = scalar_select %p337, %s338, %s339
      %p343 = pneg %p337
      %p344 = scmp.eq.s32.totalorder %s22, 7
      %p345 = por %p343, %p344
      %p346 = scmp.ne.s32.totalorder %s338, %s341
      %p347 = scmp.eq.s32.totalorder %s22, 0
      %p348 = por %p346, %p347
      %p349 = scmp.ne.s32.totalorder %s338, %s341
      %p350 = scmp.eq.s32.totalorder %s27, 7
      %p351 = por %p349, %p350
      %p352 = scmp.ne.s32.totalorder %s341, %s342
      %p353 = scmp.eq.s32.totalorder %s27, 0
      %p354 = por %p352, %p353
      %p355 = scmp.ne.s32.totalorder %s341, %s342
      %p356 = scmp.eq.s32.totalorder %s28, 7
      %p357 = por %p355, %p356
      %p359 = scmp.ne.s32.totalorder %s342, %s358
      %p360 = scmp.eq.s32.totalorder %s28, 0
      %p361 = por %p359, %p360
      %p362 = scmp.le.s32.totalorder 1, %s22
      %p363 = scmp.lt.s32.totalorder %s22, 9
      %p364 = pnand %p362, %p363
      %p365 = pneg %p364
      // Predicated region
      $region9: #{multi_head_attention.9} parent=5 // pred_check
        _
      $region10: #{multi_head_attention.9} parent=5 // pred_check_branch
        %367 = sbr.rel (%p364) target = $region12
      $region11: #{multi_head_attention.9} parent=5 // pred_region
        %s368 = ssub.s32 %s22, 1
        // Predicated region
        $region13: #{multi_head_attention.9} parent=11 // pred_check
          %p369 = pneg %p296
        $region14: #{multi_head_attention.9} parent=11 // pred_check_branch
          %371 = sbr.rel (%p369) target = $region16
        $region15: #{multi_head_attention.9} parent=11 // pred_region
          _
        $region16: #{multi_head_attention.9} parent=11 // pred_fallthru
          _
      $region12: #{multi_head_attention.9} parent=5 // pred_fallthru
        _
      %p372 = scmp.lt.s32.totalorder %s22, 8
      // Predicated region
      $region17: #{multi_head_attention.9} parent=5 // pred_check
        %p373 = pneg %p372
      $region18: #{multi_head_attention.9} parent=5 // pred_check_branch
        %375 = sbr.rel (%p373) target = $region20
      $region19: #{multi_head_attention.9} parent=5 // pred_region
        // Predicated region
        $region21: #{multi_head_attention.9} parent=19 // pred_check
          %p376 = pneg %p65
        $region22: #{multi_head_attention.9} parent=19 // pred_check_branch
          %378 = sbr.rel (%p376) target = $region24
        $region23: #{multi_head_attention.9} parent=19 // pred_region
          %p379 = scmp.lt.s32.totalorder %s29, 1
          %s380 = scalar_select %p379, %s29, 1
          %p381 = scmp.lt.s32.totalorder %s31, 3
          %s382 = scalar_select %p381, %s31, 3
          %p383 = scmp.lt.s32.totalorder %s30, 0
          %s384 = scalar_select %p383, %s30, 0
          %s385 = sadd.s32 %s384, %s382
          %s386 = smul.addr %s380, 4
          %s387 = sadd.s32 %s385, %s386
          %s388 = smul.addr %s387, 4
          %s389 = scalar_lea.vmem %s0, %s388
        $region24: #{multi_head_attention.9} parent=19 // pred_fallthru
          _
        // Predicated region
        $region25: #{multi_head_attention.9} parent=19 // pred_check
          %p390 = pneg %p95
        $region26: #{multi_head_attention.9} parent=19 // pred_check_branch
          %392 = sbr.rel (%p390) target = $region28
        $region27: #{multi_head_attention.9} parent=19 // pred_region
          %p393 = scmp.lt.s32.totalorder %s29, 1
          %s394 = scalar_select %p393, %s29, 1
          %p395 = scmp.lt.s32.totalorder %s31, 3
          %s396 = scalar_select %p395, %s31, 3
          %p397 = scmp.lt.s32.totalorder %s30, 0
          %s398 = scalar_select %p397, %s30, 0
          %s399 = sadd.s32 %s398, %s396
          %s400 = smul.addr %s394, 4
          %s401 = sadd.s32 %s399, %s400
          %s402 = smul.addr %s401, 4
          %s403 = scalar_lea.vmem %s1, %s402
        $region28: #{multi_head_attention.9} parent=19 // pred_fallthru
          _
        // Predicated region
        $region29: #{multi_head_attention.9} parent=19 // pred_check
          %p404 = pneg %p123
        $region30: #{multi_head_attention.9} parent=19 // pred_check_branch
          %406 = sbr.rel (%p404) target = $region32
        $region31: #{multi_head_attention.9} parent=19 // pred_region
          %p407 = scmp.lt.s32.totalorder %s29, 1
          %s408 = scalar_select %p407, %s29, 1
          %p409 = scmp.lt.s32.totalorder %s31, 3
          %s410 = scalar_select %p409, %s31, 3
          %s411 = smul.addr %s408, 4
          %s412 = sadd.s32 %s410, %s411
          %s413 = smul.addr %s412, 4
          %s414 = scalar_lea.vmem %s2, %s413
        $region32: #{multi_head_attention.9} parent=19 // pred_fallthru
          _
        // Predicated region
        $region33: #{multi_head_attention.9} parent=19 // pred_check
          %p415 = pneg %p151
        $region34: #{multi_head_attention.9} parent=19 // pred_check_branch
          %417 = sbr.rel (%p415) target = $region36
        $region35: #{multi_head_attention.9} parent=19 // pred_region
          %p418 = scmp.lt.s32.totalorder %s29, 1
          %s419 = scalar_select %p418, %s29, 1
          %p420 = scmp.lt.s32.totalorder %s31, 3
          %s421 = scalar_select %p420, %s31, 3
          %s422 = smul.addr %s419, 4
          %s423 = sadd.s32 %s421, %s422
          %s424 = smul.addr %s423, 4
          %s425 = scalar_lea.vmem %s3, %s424
        $region36: #{multi_head_attention.9} parent=19 // pred_fallthru
          _
        // Predicated region
        $region37: #{multi_head_attention.9} parent=19 // pred_check
          %p426 = pneg %p215
        $region38: #{multi_head_attention.9} parent=19 // pred_check_branch
          %428 = sbr.rel (%p426) target = $region40
        $region39: #{multi_head_attention.9} parent=19 // pred_region
          %s429 = smul.u32 %s29, 4
          %s430 = sadd.s32 %s429, 2
          %s431 = sadd.s32 %s430, %s31
          %p432 = scmp.lt.s32.totalorder %s431, 0
          %s433 = ssub.s32 0, %s431
          %s434 = scalar_select %p432, %s433, %s431
          %s435 = sdiv.u32.pop %s434, 5
          %s436 = srem.u32.pop %s434, 5
          %s437 = ssub.s32 0, %s436
          %s438 = scalar_select %p432, %s437, %s436
          %p439 = scmp.ne.s32.totalorder %s438, 0
          %p440 = scmp.lt.s32.totalorder %s438, 0
          %p441 = pnand %p440, %p439
          %p442 = pneg %p441
          %s443 = sadd.s32 %s438, 5
          %s444 = scalar_select %p442, %s443, %s438
          %s445 = ssub.s32 %s444, 1
          %p446 = scmp.gt.s32.totalorder %s445, 0
          %s447 = scalar_select %p446, %s445, 0
          %p448 = scmp.lt.s32.totalorder %s447, 3
          %s449 = scalar_select %p448, %s447, 3
          %s450 = smul.addr %s449, 4
          %s451 = scalar_lea.vmem %s4, %s450
          %s452 = smul.u32 %s29, 4
          %s453 = sadd.s32 %s452, 2
          %s454 = sadd.s32 %s453, %s31
          %p455 = scmp.lt.s32.totalorder %s454, 0
          %s456 = ssub.s32 0, %s454
          %s457 = scalar_select %p455, %s456, %s454
          %s458 = sdiv.u32.pop %s457, 5
          %s459 = srem.u32.pop %s457, 5
          %s460 = ssub.s32 0, %s459
          %s461 = scalar_select %p455, %s460, %s459
          %p462 = scmp.ne.s32.totalorder %s461, 0
          %p463 = scmp.lt.s32.totalorder %s461, 0
          %p464 = pnand %p463, %p462
          %p465 = pneg %p464
          %s466 = sadd.s32 %s461, 5
          %s467 = scalar_select %p465, %s466, %s461
          %s468 = ssub.s32 %s467, 1
          %p469 = scmp.gt.s32.totalorder %s468, 0
          %s470 = scalar_select %p469, %s468, 0
        $region40: #{multi_head_attention.9} parent=19 // pred_fallthru
          _
        // Predicated region
        $region41: #{multi_head_attention.9} parent=19 // pred_check
          %p471 = pneg %p243
        $region42: #{multi_head_attention.9} parent=19 // pred_check_branch
          %473 = sbr.rel (%p471) target = $region44
        $region43: #{multi_head_attention.9} parent=19 // pred_region
          %p474 = scmp.lt.s32.totalorder %s29, 1
          %s475 = scalar_select %p474, %s29, 1
          %p476 = scmp.lt.s32.totalorder %s30, 0
          %s477 = scalar_select %p476, %s30, 0
          %s478 = sadd.s32 %s477, %s475
          %s479 = smul.addr %s478, 2
          %s480 = scalar_lea.vmem %s5, %s479
        $region44: #{multi_head_attention.9} parent=19 // pred_fallthru
          _
        // Predicated region
        $region45: #{multi_head_attention.9} parent=19 // pred_check
          %p481 = pneg %p269
        $region46: #{multi_head_attention.9} parent=19 // pred_check_branch
          %483 = sbr.rel (%p481) target = $region48
        $region47: #{multi_head_attention.9} parent=19 // pred_region
          %p484 = scmp.lt.s32.totalorder %s31, 3
          %s485 = scalar_select %p484, %s31, 3
          %s486 = smul.addr %s485, 4
          %s487 = scalar_lea.vmem %s6, %s486
        $region48: #{multi_head_attention.9} parent=19 // pred_fallthru
          _
      $region20: #{multi_head_attention.9} parent=5 // pred_fallthru
        _
      %p488 = scmp.le.s32.totalorder 1, %s22
      %p489 = scmp.lt.s32.totalorder %s22, 9
      %p490 = pnand %p488, %p489
      %p491 = pneg %p490
      // Predicated region
      $region49: #{multi_head_attention.9} parent=5 // pred_check
        _
      $region50: #{multi_head_attention.9} parent=5 // pred_check_branch
        %493 = sbr.rel (%p490) target = $region52
      $region51: #{multi_head_attention.9} parent=5 // pred_region
        %s494 = ssub.s32 %s22, 1
        %p495 = scmp.lt.s32.totalorder %s32, 1
        %s496 = scalar_select %p495, %s32, 1
        %p497 = scmp.lt.s32.totalorder %s34, 3
        %s498 = scalar_select %p497, %s34, 3
        %p499 = scmp.lt.s32.totalorder %s33, 0
        %s500 = scalar_select %p499, %s33, 0
        %s501 = sadd.s32 %s500, %s498
        %s502 = smul.addr %s496, 4
        %s503 = sadd.s32 %s501, %s502
        %s504 = smul.addr %s503, 4
        %s505 = scalar_lea.vmem %s0, %s504
        %p506 = pneg %p71
        %p507 = pneg %p68
        %p508 = scmp.lt.s32.totalorder %s32, 1
        %s509 = scalar_select %p508, %s32, 1
        %p510 = scmp.lt.s32.totalorder %s34, 3
        %s511 = scalar_select %p510, %s34, 3
        %p512 = scmp.lt.s32.totalorder %s33, 0
        %s513 = scalar_select %p512, %s33, 0
        %s514 = sadd.s32 %s513, %s511
        %s515 = smul.addr %s509, 4
        %s516 = sadd.s32 %s514, %s515
        %s517 = smul.addr %s516, 4
        %s518 = scalar_lea.vmem %s1, %s517
        %p519 = pneg %p101
        %p520 = pneg %p98
        %p521 = scmp.lt.s32.totalorder %s32, 1
        %s522 = scalar_select %p521, %s32, 1
        %p523 = scmp.lt.s32.totalorder %s34, 3
        %s524 = scalar_select %p523, %s34, 3
        %s525 = smul.addr %s522, 4
        %s526 = sadd.s32 %s524, %s525
        %s527 = smul.addr %s526, 4
        %s528 = scalar_lea.vmem %s2, %s527
        %p529 = pneg %p129
        %p530 = pneg %p126
        %p531 = scmp.lt.s32.totalorder %s32, 1
        %s532 = scalar_select %p531, %s32, 1
        %p533 = scmp.lt.s32.totalorder %s34, 3
        %s534 = scalar_select %p533, %s34, 3
        %s535 = smul.addr %s532, 4
        %s536 = sadd.s32 %s534, %s535
        %s537 = smul.addr %s536, 4
        %s538 = scalar_lea.vmem %s3, %s537
        %p539 = pneg %p157
        %p540 = pneg %p154
        %s541 = smul.u32 %s32, 4
        %s542 = sadd.s32 %s541, 2
        %s543 = sadd.s32 %s542, %s34
        %p544 = scmp.lt.s32.totalorder %s543, 0
        %s545 = ssub.s32 0, %s543
        %s546 = scalar_select %p544, %s545, %s543
        %s547 = sdiv.u32.pop %s546, 5
        %s548 = srem.u32.pop %s546, 5
        %s549 = ssub.s32 0, %s548
        %s550 = scalar_select %p544, %s549, %s548
        %p551 = scmp.ne.s32.totalorder %s550, 0
        %p552 = scmp.lt.s32.totalorder %s550, 0
        %p553 = pnand %p552, %p551
        %p554 = pneg %p553
        %s555 = sadd.s32 %s550, 5
        %s556 = scalar_select %p554, %s555, %s550
        %s557 = ssub.s32 %s556, 1
        %p558 = scmp.gt.s32.totalorder %s557, 0
        %s559 = scalar_select %p558, %s557, 0
        %p560 = scmp.lt.s32.totalorder %s559, 3
        %s561 = scalar_select %p560, %s559, 3
        %s562 = smul.addr %s561, 4
        %s563 = scalar_lea.vmem %s4, %s562
        %p564 = pneg %p221
        %p565 = pneg %p218
        %p566 = scmp.lt.s32.totalorder %s32, 1
        %s567 = scalar_select %p566, %s32, 1
        %p568 = scmp.lt.s32.totalorder %s33, 0
        %s569 = scalar_select %p568, %s33, 0
        %s570 = sadd.s32 %s569, %s567
        %s571 = smul.addr %s570, 2
        %s572 = scalar_lea.vmem %s5, %s571
        %p573 = pneg %p249
        %p574 = pneg %p246
        %p575 = scmp.lt.s32.totalorder %s34, 3
        %s576 = scalar_select %p575, %s34, 3
        %s577 = smul.addr %s576, 4
        %s578 = scalar_lea.vmem %s6, %s577
        %p579 = pneg %p275
        %p580 = pneg %p272
        %p581 = pneg %p296
        %p582 = pneg %p293
        %p583 = pneg %p324
        %p584 = pneg %p321
        %s585 = sand.u32 %s311, 1
        %s586 = scalar_lea.sflag [#allocation4], %s585
        %s587 = sand.u32 %s311, 1
        %s588 = smul.addr %s587, 8
        %s589 = scalar_lea.vmem [#allocation3], %s588
        %p590 = pneg %p354
        %p591 = pneg %p351
        %s592 = sand.u32 %s341, 1
        %s593 = scalar_lea.sflag [#allocation6], %s592
        %s594 = sand.u32 %s341, 1
        %s595 = smul.addr %s594, 8
        %s596 = scalar_lea.vmem [#allocation5], %s595
        %p597 = scmp.lt.s32.totalorder %s32, 1
        %s598 = scalar_select %p597, %s32, 1
        %p599 = scmp.lt.s32.totalorder %s34, 3
        %s600 = scalar_select %p599, %s34, 3
        %p601 = scmp.lt.s32.totalorder %s33, 0
        %s602 = scalar_select %p601, %s33, 0
        %s603 = sadd.s32 %s602, %s600
        %s604 = smul.addr %s598, 4
        %s605 = sadd.s32 %s603, %s604
        %s606 = smul.addr %s605, 4
        %s607 = scalar_lea.vmem %s0, %s606
        %p608 = scmp.lt.s32.totalorder %s32, 1
        %s609 = scalar_select %p608, %s32, 1
        %p610 = scmp.lt.s32.totalorder %s34, 3
        %s611 = scalar_select %p610, %s34, 3
        %p612 = scmp.lt.s32.totalorder %s33, 0
        %s613 = scalar_select %p612, %s33, 0
        %s614 = sadd.s32 %s613, %s611
        %s615 = smul.addr %s609, 4
        %s616 = sadd.s32 %s614, %s615
        %s617 = smul.addr %s616, 4
        %s618 = scalar_lea.vmem %s1, %s617
        %p619 = scmp.lt.s32.totalorder %s32, 1
        %s620 = scalar_select %p619, %s32, 1
        %p621 = scmp.lt.s32.totalorder %s34, 3
        %s622 = scalar_select %p621, %s34, 3
        %s623 = smul.addr %s620, 4
        %s624 = sadd.s32 %s622, %s623
        %s625 = smul.addr %s624, 4
        %s626 = scalar_lea.vmem %s2, %s625
        %p627 = scmp.lt.s32.totalorder %s32, 1
        %s628 = scalar_select %p627, %s32, 1
        %p629 = scmp.lt.s32.totalorder %s34, 3
        %s630 = scalar_select %p629, %s34, 3
        %s631 = smul.addr %s628, 4
        %s632 = sadd.s32 %s630, %s631
        %s633 = smul.addr %s632, 4
        %s634 = scalar_lea.vmem %s3, %s633
        %s635 = smul.u32 %s32, 4
        %s636 = sadd.s32 %s635, 2
        %s637 = sadd.s32 %s636, %s34
        %p638 = scmp.lt.s32.totalorder %s637, 0
        %s639 = ssub.s32 0, %s637
        %s640 = scalar_select %p638, %s639, %s637
        %s641 = sdiv.u32.pop %s640, 5
        %s642 = srem.u32.pop %s640, 5
        %s643 = ssub.s32 0, %s642
        %s644 = scalar_select %p638, %s643, %s642
        %p645 = scmp.ne.s32.totalorder %s644, 0
        %p646 = scmp.lt.s32.totalorder %s644, 0
        %p647 = pnand %p646, %p645
        %p648 = pneg %p647
        %s649 = sadd.s32 %s644, 5
        %s650 = scalar_select %p648, %s649, %s644
        %s651 = ssub.s32 %s650, 1
        %p652 = scmp.gt.s32.totalorder %s651, 0
        %s653 = scalar_select %p652, %s651, 0
        %p654 = scmp.lt.s32.totalorder %s653, 3
        %s655 = scalar_select %p654, %s653, 3
        %s656 = smul.addr %s655, 4
        %s657 = scalar_lea.vmem %s4, %s656
        %s658 = smul.u32 %s32, 4
        %s659 = sadd.s32 %s658, 2
        %s660 = sadd.s32 %s659, %s34
        %p661 = scmp.lt.s32.totalorder %s660, 0
        %s662 = ssub.s32 0, %s660
        %s663 = scalar_select %p661, %s662, %s660
        %s664 = sdiv.u32.pop %s663, 5
        %s665 = srem.u32.pop %s663, 5
        %s666 = ssub.s32 0, %s665
        %s667 = scalar_select %p661, %s666, %s665
        %p668 = scmp.ne.s32.totalorder %s667, 0
        %p669 = scmp.lt.s32.totalorder %s667, 0
        %p670 = pnand %p669, %p668
        %p671 = pneg %p670
        %s672 = sadd.s32 %s667, 5
        %s673 = scalar_select %p671, %s672, %s667
        %s674 = ssub.s32 %s673, 1
        %p675 = scmp.gt.s32.totalorder %s674, 0
        %s676 = scalar_select %p675, %s674, 0
        %p677 = scmp.lt.s32.totalorder %s32, 1
        %s678 = scalar_select %p677, %s32, 1
        %p679 = scmp.lt.s32.totalorder %s33, 0
        %s680 = scalar_select %p679, %s33, 0
        %s681 = sadd.s32 %s680, %s678
        %s682 = smul.addr %s681, 2
        %s683 = scalar_lea.vmem %s5, %s682
        %p684 = scmp.lt.s32.totalorder %s34, 3
        %s685 = scalar_select %p684, %s34, 3
        %s686 = smul.addr %s685, 4
        %s687 = scalar_lea.vmem %s6, %s686
        %p691 = scmp.eq.s32.totalorder %s34, 0
        // Predicated region
        $region53: #{multi_head_attention.9} parent=51 // pred_check
          %p692 = pneg %p691
        $region54: #{multi_head_attention.9} parent=51 // pred_check_branch
          %694 = sbr.rel (%p692) target = $region56
        $region55: #{multi_head_attention.9} parent=51 // pred_region
          %vm695 = vcmask 261120
          %696 = vst.msk [vmem:[#allocation2] sm:$0xff] %vm695, 0.0
        $region56: #{multi_head_attention.9} parent=51 // pred_fallthru
          _
        %v697 = vld [vmem:[%s607] sm:$0xf]
        %v698 = vld [vmem:[%s626] sm:$0xf]
        %v699 = vld [vmem:[%s618] sm:$0xf]
        %v700 = vld [vmem:[%s657] sm:$0xf]
        %vm701 = vcmask 64512
        %v703 = vsel %vm701, %v699, 0
        %v706 = vsel %vm701, %v700, 0
        %708 = vmatpush.bf16.xpose.msra.mxu0 0
        %709 = vmatpush.bf16.xpose.msra.mxu0 0
        %710 = vmatpush.bf16.xpose.msra.mxu0 0
        %711 = vmatpush.bf16.xpose.msra.mxu0 0
        %712 = vmatpush.bf16.xpose.msra.mxu0 0
        %713 = vmatpush.bf16.xpose.msra.mxu0 0
        %714 = vmatpush.bf16.xpose.msra.mxu0 0
        %715 = vmatpush.bf16.xpose.msra.mxu0 %v706
        %716 = vmatmul.bf16.gmra.mxu0 %v703
        %v717 = vpop.f32.mrf.mxu0
        %v718 = vadd.f32 0.0, %v717
        %v719 = vpop.f32.mrf.mxu0
        %720 = vdwg.mxu0
        %v722 = vsel %vm701, %v697, 0
        %v725 = vsel %vm701, %v698, 0
        %727 = vmatpush.bf16.xpose.msra.mxu0 0
        %728 = vmatpush.bf16.xpose.msra.mxu0 0
        %729 = vmatpush.bf16.xpose.msra.mxu0 0
        %730 = vmatpush.bf16.xpose.msra.mxu0 0
        %731 = vmatpush.bf16.xpose.msra.mxu0 0
        %732 = vmatpush.bf16.xpose.msra.mxu0 0
        %733 = vmatpush.bf16.xpose.msra.mxu0 0
        %734 = vmatpush.bf16.xpose.msra.mxu0 %v725
        %735 = vmatmul.bf16.gmra.mxu0 %v722
        %v736 = vpop.f32.mrf.mxu0
        %v737 = vadd.f32 %v718, %v736
        %v738 = vpop.f32.mrf.mxu0
        %739 = vdwg.mxu0
        %v740 = vld [vmem:[%s683] sm:$0x3]
        %vm741 = vnez %v740
        %v742 = vsel %vm741, 16843009, 0
        %v743 = vunpack.c.0.s8 %v742
        %vm744 = vcmp.ne.s32.totalorder %v743, 0
        %v745 = vsel %vm744, -1e+09, %v737
        %v746 = vsel %vm701, %v745, -inf
        %747 = vmax.xlane.f32.xlu0 %v746
        %v748 = vpop.xlane.xlu0 %747
        %v749 = vsub.f32 %v745, %v748
        %v750 = vmul.f32 %v749, 1.442695
        %v751 = vpow.pop %v750
        %v752 = vsel %vm701, %v751, 0.0
        %753 = vadd.xlane.f32.xlu0 %v752
        %v754 = vpop.xlane.xlu0 %753
        %v755 = vrcp.pop %v754
        %v756 = vmul.f32 %v751, %v755
        %757 = vst.msk [vmem:[%s596] sm:$0xff] %vm701, %v756
        %v758 = vpack.c.bf16 %v756, %v756
        %v759 = vld [vmem:[%s634] sm:$0xf]
        %v761 = vsel %vm701, %v758, 0
        %vm763 = vcmask 1043456
        %v765 = vsel %vm763, %v759, 0
        %767 = vmatpush.bf16.msra.mxu0 0
        %768 = vmatpush.bf16.msra.mxu0 0
        %769 = vmatpush.bf16.msra.mxu0 0
        %770 = vmatpush.bf16.msra.mxu0 0
        %771 = vmatpush.bf16.msra.mxu0 0
        %772 = vmatpush.bf16.msra.mxu0 0
        %773 = vmatpush.bf16.msra.mxu0 0
        %774 = vmatpush.bf16.msra.mxu0 %v765
        %775 = vmatmul.bf16.gmra.mxu0 %v761
        %v776 = vpop.f32.mrf.mxu0
        %v777 = vadd.f32 0.0, %v776
        %v778 = vpop.f32.mrf.mxu0
        %779 = vdwg.mxu0
        %v780 = vld [vmem:[#allocation2] sm:$0xff]
        %v781 = vpack.c.bf16 %v777, %v777
        %v782 = vld [vmem:[%s687] sm:$0xf]
        %v784 = vsel %vm701, %v781, 0
        %v787 = vsel %vm763, %v782, 0
        %789 = vmatpush.bf16.msra.mxu0 0
        %790 = vmatpush.bf16.msra.mxu0 0
        %791 = vmatpush.bf16.msra.mxu0 0
        %792 = vmatpush.bf16.msra.mxu0 0
        %793 = vmatpush.bf16.msra.mxu0 0
        %794 = vmatpush.bf16.msra.mxu0 0
        %795 = vmatpush.bf16.msra.mxu0 0
        %796 = vmatpush.bf16.msra.mxu0 %v787
        %797 = vmatmul.bf16.gmra.mxu0 %v784
        %v798 = vpop.f32.mrf.mxu0
        %v799 = vadd.f32 0.0, %v798
        %v800 = vpop.f32.mrf.mxu0
        %801 = vdwg.mxu0
        %v802 = vadd.f32 %v780, %v799
        %vm803 = vcmask 261120
        %804 = vst.msk [vmem:[#allocation2] sm:$0xff] %vm803, %v802
        %p805 = scmp.eq.s32.totalorder %s34, 3
        // Predicated region
        $region57: #{multi_head_attention.9} parent=51 // pred_check
          %p806 = pneg %p805
        $region58: #{multi_head_attention.9} parent=51 // pred_check_branch
          %808 = sbr.rel (%p806) target = $region60
        $region59: #{multi_head_attention.9} parent=51 // pred_region
          %v809 = vld [vmem:[#allocation2] sm:$0xff]
          %v810 = vld [vmem:[%s7] sm:$0x1]
          %v812 = vperm.slane %v810, 0
          %v814 = vadd.f32 %v809, %v812
          %815 = vst.msk [vmem:[%s589] sm:$0xff] %vm803, %v814
        $region60: #{multi_head_attention.9} parent=51 // pred_fallthru
          _
        %s816 = sand.u32 %s311, 1
        %s817 = scalar_lea.sflag [#allocation4], %s816
        %s818 = sand.u32 %s311, 1
        %s819 = smul.addr %s818, 8
        %s820 = scalar_lea.vmem [#allocation3], %s819
        %s821 = sand.u32 %s341, 1
        %s822 = scalar_lea.sflag [#allocation6], %s821
        %s823 = sand.u32 %s341, 1
        %s824 = smul.addr %s823, 8
        %s825 = scalar_lea.vmem [#allocation5], %s824
        // Predicated region
        $region61: #{multi_head_attention.9} parent=51 // pred_check
          %p826 = pneg %p321
        $region62: #{multi_head_attention.9} parent=51 // pred_check_branch
          %828 = sbr.rel (%p826) target = $region64
        $region63: #{multi_head_attention.9} parent=51 // pred_region
          %830 = vsyncadd %s817, 0
          %s831 = sadd.s32 %s33, %s32
          %s832 = smul.addr %s831, 8
          %s833 = scalar_lea.hbm %s8, %s832
          %s835 = sshll.u32 %s820, 4
          %s836 = int_to_ptr.vmem [resolvable:$true] %s835
          %s837 = sshll.u32 %s833, 4
          %s838 = int_to_ptr.hbm [resolvable:$true] %s837
          %840 = dma.vmem_to_hbm [thread:$0]  %s836, 128, %s838, %s817
        $region64: #{multi_head_attention.9} parent=51 // pred_fallthru
          _
        // Predicated region
        $region65: #{multi_head_attention.9} parent=51 // pred_check
          %p841 = pneg %p351
        $region66: #{multi_head_attention.9} parent=51 // pred_check_branch
          %843 = sbr.rel (%p841) target = $region68
        $region67: #{multi_head_attention.9} parent=51 // pred_region
          %845 = vsyncadd %s822, 0
          %s846 = sadd.s32 %s33, %s34
          %s847 = smul.addr %s32, 4
          %s848 = sadd.s32 %s846, %s847
          %s849 = smul.addr %s848, 8
          %s850 = scalar_lea.hbm %s9, %s849
          %s852 = sshll.u32 %s825, 4
          %s853 = int_to_ptr.vmem [resolvable:$true] %s852
          %s854 = sshll.u32 %s850, 4
          %s855 = int_to_ptr.hbm [resolvable:$true] %s854
          %857 = dma.vmem_to_hbm [thread:$0]  %s853, 128, %s855, %s822
        $region68: #{multi_head_attention.9} parent=51 // pred_fallthru
          _
      $region52: #{multi_head_attention.9} parent=5 // pred_fallthru
        _
      %p858 = scmp.le.s32.totalorder 2, %s22
      // Predicated region
      $region69: #{multi_head_attention.9} parent=5 // pred_check
        %p859 = pneg %p858
      $region70: #{multi_head_attention.9} parent=5 // pred_check_branch
        %861 = sbr.rel (%p859) target = $region72
      $region71: #{multi_head_attention.9} parent=5 // pred_region
        %s862 = ssub.s32 %s22, 2
        // Predicated region
        $region73: #{multi_head_attention.9} parent=71 // pred_check
          %p863 = pneg %p327
        $region74: #{multi_head_attention.9} parent=71 // pred_check_branch
          %865 = sbr.rel (%p863) target = $region76
        $region75: #{multi_head_attention.9} parent=71 // pred_region
          %s866 = sand.u32 %s312, 1
          %s867 = scalar_lea.sflag [#allocation4], %s866
          %s868 = sand.u32 %s312, 1
          %s869 = smul.addr %s868, 8
          %s870 = scalar_lea.vmem [#allocation3], %s869
          %872 = dma.done %s867, 128
        $region76: #{multi_head_attention.9} parent=71 // pred_fallthru
          _
        // Predicated region
        $region77: #{multi_head_attention.9} parent=71 // pred_check
          %p873 = pneg %p357
        $region78: #{multi_head_attention.9} parent=71 // pred_check_branch
          %875 = sbr.rel (%p873) target = $region80
        $region79: #{multi_head_attention.9} parent=71 // pred_region
          %s876 = sand.u32 %s342, 1
          %s877 = scalar_lea.sflag [#allocation6], %s876
          %s878 = sand.u32 %s342, 1
          %s879 = smul.addr %s878, 8
          %s880 = scalar_lea.vmem [#allocation5], %s879
          %882 = dma.done %s877, 128
        $region80: #{multi_head_attention.9} parent=71 // pred_fallthru
          _
      $region72: #{multi_head_attention.9} parent=5 // pred_fallthru
        _
    $region6: #{multi_head_attention.9} parent=1 // loop_footer
      %s26 = sadd.s32 1, %s22
    $region7: #{multi_head_attention.9} parent=1 // loop_footer_branch
      %21 = sbr.rel target = $region3
    $region8: #{multi_head_attention.9} parent=1 // loop_exit
      _
    %883 = vsyncpa [#allocation4], 1
    %s884 = scalar_lea.sflag [#allocation4], 1
    %885 = vsyncpa %s884, 1
    %886 = vsyncpa [#allocation6], 1
    %s887 = scalar_lea.sflag [#allocation6], 1
    %888 = vsyncpa %s887, 1

</llo_original>
